<compile_context>
chip_gen: v7x
topology: tpu7x:2x2x1
jax: 0.10.0
libtpu: 0.0.40
codegen_flags: <defaults>
</compile_context>

<pallas_src>
import functools

import jax
import jax.numpy as jnp
from jax.experimental import pallas as pl
from jax.experimental.pallas import tpu as pltpu

_CHANNELS = [3, 16, 32, 64, 128, 256, 128, 64, 32, 16, 3]
_NUM_LAYERS = len(_CHANNELS) - 1  # 10
_COMPUTE_DTYPE = jnp.bfloat16     # MXU operand / inter-layer activation dtype
_FOLD_MAX_CIN = 128               # fold taps into contraction dim when Cin <= this


@functools.cache
def _vmem_budget_and_limit():
    """(tile-buffer budget, vmem_limit_bytes) sized for the current TPU gen."""
    try:
        cap = int(pltpu.get_tpu_info().vmem_capacity_bytes)
    except Exception:  # unknown generation -> assume the smallest (v7x: 64 MiB)
        cap = 64 * 1024 * 1024
    budget = max(16 * 1024 * 1024, int(cap * 0.40))
    limit = min(int(cap * 0.75), 100 * 1024 * 1024)
    return budget, limit


@functools.cache
def _element_halo_ok():
    """Probe overlapping halo row-slabs via a pl.Element block dim.

    Runs a tiny copy kernel and checks the result numerically; if the running
    build rejects (or mis-handles) element-offset indexing, conv layers fall
    back to whole-image input blocks.
    """
    try:
        x = jnp.arange(1 * 12 * 8 * 128, dtype=jnp.float32).reshape(1, 12, 8, 128)

        def copy_kernel(x_ref, o_ref):
            o_ref[...] = x_ref[...]

        out = pl.pallas_call(
            copy_kernel,
            out_shape=jax.ShapeDtypeStruct((1, 16, 8, 128), jnp.float32),
            grid=(2,),
            in_specs=[pl.BlockSpec((1, pl.Element(8), 8, 128),
                                   lambda i: (0, i * 4, 0, 0))],
            out_specs=pl.BlockSpec((1, 8, 8, 128), lambda i: (0, i, 0, 0)),
        )(x)
        expected = jnp.concatenate([x[:, 0:8], x[:, 4:12]], axis=1)
        return bool(jnp.array_equal(jax.block_until_ready(out), expected))
    except Exception:
        return False


def _conv_vmem_estimate(th, W, cin, cout, out_bytes, fold):
    in_b = jnp.dtype(_COMPUTE_DTYPE).itemsize
    slab = (th + 2) * (W + 2) * cin * in_b           # input halo slab
    out = th * W * cout * out_bytes                  # output tile
    acc = 0 if fold else th * W * cout * 4           # f32 accumulator scratch
    wts = 9 * cin * cout * in_b                      # resident weights
    tmp = th * W * cin * in_b * (9 if fold else 2)   # im2col / relayout temps
    val = th * W * cout * 4                          # live f32 result value
    return 2 * slab + 2 * out + acc + wts + tmp + val  # in/out double-buffered


def _pick_tile_h(H, W, cin, cout, out_bytes, fold, budget):
    divisors = [d for d in range(1, H + 1) if H % d == 0]
    best = divisors[0]
    for th in divisors:
        if _conv_vmem_estimate(th, W, cin, cout, out_bytes, fold) <= budget:
            best = th
    # Prefer >= 2 row tiles when the image allows it: more grid points for the
    # megacore and better DMA/compute overlap.
    if best == H and H >= 16 and H % 2 == 0:
        best = H // 2
    return best


def _apply_bias_act(y, b_ref, act):
    y = y + b_ref[...]                     # (TH*W, Cout) + (1, Cout), f32
    if act == "relu":
        return jnp.maximum(y, 0.0)
    if act == "sigmoid":
        return jax.nn.sigmoid(y)
    raise ValueError(act)


def _conv3x3_fold_kernel(x_ref, w_ref, b_ref, o_ref, *, TH, W, Cin, Cout, act):
    """3x3 same conv via im2col: ONE matmul with K = 9*Cin (Cin <= 128).

    x_ref: (1, TH+2, W+2, Cin)  bf16 zero-padded halo slab
    w_ref: (9*Cin, Cout)        bf16 weights, rows ordered (dy, dx, cin)
    b_ref: (1, Cout)            f32 bias
    o_ref: (1, TH, W, Cout)     output tile
    """
    patch = jnp.concatenate(
        [x_ref[0, dy:dy + TH, dx:dx + W, :].reshape(TH * W, Cin)
         for dy in range(3) for dx in range(3)], axis=-1)
    y = jnp.dot(patch, w_ref[...], preferred_element_type=jnp.float32)
    y = _apply_bias_act(y, b_ref, act)
    o_ref[...] = y.reshape(1, TH, W, Cout).astype(o_ref.dtype)


def _conv3x3_taps_kernel(x_ref, w_ref, b_ref, o_ref, acc_ref, *,
                         TH, W, Cin, Cout, act):
    """3x3 same conv as 9 shifted matmuls (Cin >= 256 fills the MXU K dim).

    acc_ref: (TH*W, Cout) f32 VMEM scratch accumulator.
    """
    for tap in range(9):
        dy, dx = tap // 3, tap % 3
        patch = x_ref[0, dy:dy + TH, dx:dx + W, :].reshape(TH * W, Cin)
        prod = jnp.dot(patch, w_ref[tap * Cin:(tap + 1) * Cin, :],
                       preferred_element_type=jnp.float32)
        if tap == 0:
            acc_ref[...] = prod
        else:
            acc_ref[...] += prod

    y = _apply_bias_act(acc_ref[...], b_ref, act)
    o_ref[...] = y.reshape(1, TH, W, Cout).astype(o_ref.dtype)


def conv3x3_same(x_nhwc, w, b, act, out_dtype):
    """x_nhwc: (N, H, W, Cin); w: (3, 3, Cin, Cout); b: (Cout,)."""
    N, H, W, Cin = x_nhwc.shape
    Cout = w.shape[-1]
    fold = Cin <= _FOLD_MAX_CIN
    out_bytes = jnp.dtype(out_dtype).itemsize
    budget, vmem_limit = _vmem_budget_and_limit()

    if _element_halo_ok():
        TH = _pick_tile_h(H, W, Cin, Cout, out_bytes, fold, budget)
    else:
        TH = H
    nH = H // TH

    # Glue in plain JAX: zero "same" padding + operand dtype/layout prep.
    x_pad = jnp.pad(x_nhwc.astype(_COMPUTE_DTYPE),
                    ((0, 0), (1, 1), (1, 1), (0, 0)))
    w_flat = w.astype(_COMPUTE_DTYPE).reshape(9 * Cin, Cout)  # (dy, dx, cin)-major
    b2 = b.astype(jnp.float32).reshape(1, Cout)

    if nH > 1:
        # Overlapping halo slabs via element-offset indexing on the padded rows.
        x_spec = pl.BlockSpec((1, pl.Element(TH + 2), W + 2, Cin),
                              lambda n, h: (n, h * TH, 0, 0))
    else:
        x_spec = pl.BlockSpec((1, H + 2, W + 2, Cin), lambda n, h: (n, 0, 0, 0))

    if fold:
        kernel = functools.partial(_conv3x3_fold_kernel, TH=TH, W=W,
                                   Cin=Cin, Cout=Cout, act=act)
        scratch = []
    else:
        kernel = functools.partial(_conv3x3_taps_kernel, TH=TH, W=W,
                                   Cin=Cin, Cout=Cout, act=act)
        scratch = [pltpu.VMEM((TH * W, Cout), jnp.float32)]

    return pl.pallas_call(
        kernel,
        out_shape=jax.ShapeDtypeStruct((N, H, W, Cout), out_dtype),
        grid_spec=pltpu.PrefetchScalarGridSpec(
            num_scalar_prefetch=0,
            grid=(N, nH),
            in_specs=[
                x_spec,
                pl.BlockSpec((9 * Cin, Cout), lambda n, h: (0, 0)),
                pl.BlockSpec((1, Cout), lambda n, h: (0, 0)),
            ],
            out_specs=pl.BlockSpec((1, TH, W, Cout), lambda n, h: (n, h, 0, 0)),
            scratch_shapes=scratch,
        ),
        compiler_params=pltpu.CompilerParams(
            dimension_semantics=("parallel", "parallel"),
            vmem_limit_bytes=vmem_limit,
        ),
    )(x_pad, w_flat, b2)


def init_params(key):
    """Deterministic synthetic parameters matching the nn.Conv2d shapes."""
    params = []
    for i in range(_NUM_LAYERS):
        cin, cout = _CHANNELS[i], _CHANNELS[i + 1]
        key, wk, bk = jax.random.split(key, 3)
        scale = (2.0 / (cin * 9)) ** 0.5
        w = scale * jax.random.normal(wk, (3, 3, cin, cout), jnp.float32)
        b = 0.01 * jax.random.normal(bk, (cout,), jnp.float32)
        params.append((w, b))
    return params


def denoise_cnn_forward(x_nchw, params):
    """Forward pass matching DenoiseCNN: NCHW in, NCHW out (f32)."""
    x = jnp.transpose(x_nchw, (0, 2, 3, 1))          # NCHW -> NHWC
    for i, (w, b) in enumerate(params):
        last = i == _NUM_LAYERS - 1
        x = conv3x3_same(x, w, b,
                         act="sigmoid" if last else "relu",
                         out_dtype=jnp.float32 if last else _COMPUTE_DTYPE)
    return jnp.transpose(x, (0, 3, 1, 2))            # NHWC -> NCHW


def _reference_forward(x_nchw, params):
    """Plain-JAX (lax.conv) reference with matching bf16-operand numerics."""
    x = x_nchw
    for i, (w, b) in enumerate(params):
        last = i == _NUM_LAYERS - 1
        w_oihw = jnp.transpose(w, (3, 2, 0, 1)).astype(_COMPUTE_DTYPE)
        y = jax.lax.conv_general_dilated(
            x.astype(_COMPUTE_DTYPE), w_oihw, (1, 1), "SAME",
            dimension_numbers=("NCHW", "OIHW", "NCHW"),
            preferred_element_type=jnp.float32)
        y = y + b.reshape(1, -1, 1, 1)
        y = jax.nn.sigmoid(y) if last else jnp.maximum(y, 0.0)
        x = y.astype(jnp.float32 if last else _COMPUTE_DTYPE)
    return x.astype(jnp.float32)


if __name__ == "__main__":
    key = jax.random.PRNGKey(0)
    pkey, xkey = jax.random.split(key)

    params = init_params(pkey)
    x = jax.random.uniform(xkey, (2, 3, 16, 16), jnp.float32)   # NCHW like PyTorch

    out = jax.block_until_ready(denoise_cnn_forward(x, params))
    assert out.shape == (2, 3, 16, 16), out.shape

    ref = jax.block_until_ready(_reference_forward(x, params))
    err = float(jnp.max(jnp.abs(out - ref)))
    assert err < 3e-2, err

    print("KERNEL_OK")
</pallas_src>

<mosaic_0001>
module attributes {stable_mosaic.version = 11 : i64} {
  func.func @_conv3x3_fold_kernel(%arg0: i32, %arg1: i32, %arg2: memref<1x18x18x3xbf16, #tpu.memory_space<vmem>>, %arg3: memref<27x16xbf16, #tpu.memory_space<vmem>>, %arg4: memref<1x16xf32, #tpu.memory_space<vmem>>, %arg5: memref<1x16x16x16xbf16, #tpu.memory_space<vmem>>) attributes {dimension_semantics = [#tpu.dimension_semantics<parallel>, #tpu.dimension_semantics<parallel>], iteration_bounds = array<i64: 2, 1>, scalar_prefetch = 0 : i64, scratch_operands = 0 : i64, tpu.core_type = #tpu.core_type<tc>, window_params = [{transform_indices = @transform_0, window_bounds = array<i64: 1, 18, 18, 3>}, {pipeline_mode = #tpu.pipeline_mode<synchronous>, transform_indices = @transform_1, window_bounds = array<i64: 27, 16>}, {pipeline_mode = #tpu.pipeline_mode<synchronous>, transform_indices = @transform_2, window_bounds = array<i64: 1, 16>}, {transform_indices = @transform_3, window_bounds = array<i64: 1, 16, 16, 16>}]} {
    %c0 = arith.constant 0 : index
    %c0_0 = arith.constant 0 : index
    %c0_1 = arith.constant 0 : index
    %c0_2 = arith.constant 0 : index
    %0 = vector.load %arg2[%c0, %c0_0, %c0_1, %c0_2] : memref<1x18x18x3xbf16, #tpu.memory_space<vmem>>, vector<1x16x16x3xbf16>
    %1 = vector.shape_cast %0 : vector<1x16x16x3xbf16> to vector<16x16x3xbf16>
    %2 = vector.shape_cast %1 : vector<16x16x3xbf16> to vector<256x3xbf16>
    %c0_3 = arith.constant 0 : index
    %c0_4 = arith.constant 0 : index
    %c1 = arith.constant 1 : index
    %c0_5 = arith.constant 0 : index
    %3 = vector.load %arg2[%c0_3, %c0_4, %c1, %c0_5] : memref<1x18x18x3xbf16, #tpu.memory_space<vmem>>, vector<1x16x16x3xbf16>
    %4 = vector.shape_cast %3 : vector<1x16x16x3xbf16> to vector<16x16x3xbf16>
    %5 = vector.shape_cast %4 : vector<16x16x3xbf16> to vector<256x3xbf16>
    %c0_6 = arith.constant 0 : index
    %c0_7 = arith.constant 0 : index
    %c2 = arith.constant 2 : index
    %c0_8 = arith.constant 0 : index
    %6 = vector.load %arg2[%c0_6, %c0_7, %c2, %c0_8] : memref<1x18x18x3xbf16, #tpu.memory_space<vmem>>, vector<1x16x16x3xbf16>
    %7 = vector.shape_cast %6 : vector<1x16x16x3xbf16> to vector<16x16x3xbf16>
    %8 = vector.shape_cast %7 : vector<16x16x3xbf16> to vector<256x3xbf16>
    %c0_9 = arith.constant 0 : index
    %c1_10 = arith.constant 1 : index
    %c0_11 = arith.constant 0 : index
    %c0_12 = arith.constant 0 : index
    %9 = vector.load %arg2[%c0_9, %c1_10, %c0_11, %c0_12] : memref<1x18x18x3xbf16, #tpu.memory_space<vmem>>, vector<1x16x16x3xbf16>
    %10 = vector.shape_cast %9 : vector<1x16x16x3xbf16> to vector<16x16x3xbf16>
    %11 = vector.shape_cast %10 : vector<16x16x3xbf16> to vector<256x3xbf16>
    %c0_13 = arith.constant 0 : index
    %c1_14 = arith.constant 1 : index
    %c1_15 = arith.constant 1 : index
    %c0_16 = arith.constant 0 : index
    %12 = vector.load %arg2[%c0_13, %c1_14, %c1_15, %c0_16] : memref<1x18x18x3xbf16, #tpu.memory_space<vmem>>, vector<1x16x16x3xbf16>
    %13 = vector.shape_cast %12 : vector<1x16x16x3xbf16> to vector<16x16x3xbf16>
    %14 = vector.shape_cast %13 : vector<16x16x3xbf16> to vector<256x3xbf16>
    %c0_17 = arith.constant 0 : index
    %c1_18 = arith.constant 1 : index
    %c2_19 = arith.constant 2 : index
    %c0_20 = arith.constant 0 : index
    %15 = vector.load %arg2[%c0_17, %c1_18, %c2_19, %c0_20] : memref<1x18x18x3xbf16, #tpu.memory_space<vmem>>, vector<1x16x16x3xbf16>
    %16 = vector.shape_cast %15 : vector<1x16x16x3xbf16> to vector<16x16x3xbf16>
    %17 = vector.shape_cast %16 : vector<16x16x3xbf16> to vector<256x3xbf16>
    %c0_21 = arith.constant 0 : index
    %c2_22 = arith.constant 2 : index
    %c0_23 = arith.constant 0 : index
    %c0_24 = arith.constant 0 : index
    %18 = vector.load %arg2[%c0_21, %c2_22, %c0_23, %c0_24] : memref<1x18x18x3xbf16, #tpu.memory_space<vmem>>, vector<1x16x16x3xbf16>
    %19 = vector.shape_cast %18 : vector<1x16x16x3xbf16> to vector<16x16x3xbf16>
    %20 = vector.shape_cast %19 : vector<16x16x3xbf16> to vector<256x3xbf16>
    %c0_25 = arith.constant 0 : index
    %c2_26 = arith.constant 2 : index
    %c1_27 = arith.constant 1 : index
    %c0_28 = arith.constant 0 : index
    %21 = vector.load %arg2[%c0_25, %c2_26, %c1_27, %c0_28] : memref<1x18x18x3xbf16, #tpu.memory_space<vmem>>, vector<1x16x16x3xbf16>
    %22 = vector.shape_cast %21 : vector<1x16x16x3xbf16> to vector<16x16x3xbf16>
    %23 = vector.shape_cast %22 : vector<16x16x3xbf16> to vector<256x3xbf16>
    %c0_29 = arith.constant 0 : index
    %c2_30 = arith.constant 2 : index
    %c2_31 = arith.constant 2 : index
    %c0_32 = arith.constant 0 : index
    %24 = vector.load %arg2[%c0_29, %c2_30, %c2_31, %c0_32] : memref<1x18x18x3xbf16, #tpu.memory_space<vmem>>, vector<1x16x16x3xbf16>
    %25 = vector.shape_cast %24 : vector<1x16x16x3xbf16> to vector<16x16x3xbf16>
    %26 = vector.shape_cast %25 : vector<16x16x3xbf16> to vector<256x3xbf16>
    %27 = tpu.concatenate %2, %5, %8, %11, %14, %17, %20, %23, %26 in 1 : vector<256x3xbf16>, vector<256x3xbf16>, vector<256x3xbf16>, vector<256x3xbf16>, vector<256x3xbf16>, vector<256x3xbf16>, vector<256x3xbf16>, vector<256x3xbf16>, vector<256x3xbf16> -> vector<256x27xbf16>
    %c0_33 = arith.constant 0 : index
    %c0_34 = arith.constant 0 : index
    %28 = vector.load %arg3[%c0_33, %c0_34] : memref<27x16xbf16, #tpu.memory_space<vmem>>, vector<27x16xbf16>
    %cst = arith.constant dense<0.000000e+00> : vector<256x16xf32>
    %29 = tpu.matmul %27, %28, %cst {dimension_numbers = #tpu.dot_dimension_numbers<[1], [0], [0], [1], [0, 0, 1, 1], [], []>} : vector<256x27xbf16>, vector<27x16xbf16>, vector<256x16xf32> -> vector<256x16xf32>
    %c0_35 = arith.constant 0 : index
    %c0_36 = arith.constant 0 : index
    %30 = vector.load %arg4[%c0_35, %c0_36] : memref<1x16xf32, #tpu.memory_space<vmem>>, vector<1x16xf32>
    %31 = vector.broadcast %30 : vector<1x16xf32> to vector<256x16xf32>
    %32 = arith.addf %29, %31 : vector<256x16xf32>
    %cst_37 = arith.constant 0.000000e+00 : f32
    %33 = vector.broadcast %cst_37 : f32 to vector<256x16xf32>
    %34 = arith.maximumf %32, %33 : vector<256x16xf32>
    %35 = vector.shape_cast %34 : vector<256x16xf32> to vector<1x16x16x16xf32>
    %36 = arith.truncf %35 : vector<1x16x16x16xf32> to vector<1x16x16x16xbf16>
    %c0_38 = arith.constant 0 : index
    %c0_39 = arith.constant 0 : index
    %c0_40 = arith.constant 0 : index
    %c0_41 = arith.constant 0 : index
    %37 = vector.load %arg5[%c0_38, %c0_39, %c0_40, %c0_41] : memref<1x16x16x16xbf16, #tpu.memory_space<vmem>>, vector<1x16x16x16xbf16>
    tpu.vector_store %arg5[%c0_38, %c0_39, %c0_40, %c0_41], %36 {strides = array<i32>} : memref<1x16x16x16xbf16, #tpu.memory_space<vmem>>, vector<1x16x16x16xbf16>,
    return
  }
  func.func @transform_0(%arg0: i32, %arg1: i32) -> (i32, i32, i32, i32) {
    %c0_i32 = arith.constant 0 : i32
    %c0_i32_0 = arith.constant 0 : i32
    %c0_i32_1 = arith.constant 0 : i32
    %c0_i32_2 = arith.constant 0 : i32
    return %arg0, %c0_i32, %c0_i32_0, %c0_i32_1 : i32, i32, i32, i32
  }
  func.func @transform_1(%arg0: i32, %arg1: i32) -> (i32, i32) {
    %c0_i32 = arith.constant 0 : i32
    %c0_i32_0 = arith.constant 0 : i32
    %c0_i32_1 = arith.constant 0 : i32
    return %c0_i32, %c0_i32_0 : i32, i32
  }
  func.func @transform_2(%arg0: i32, %arg1: i32) -> (i32, i32) {
    %c0_i32 = arith.constant 0 : i32
    %c0_i32_0 = arith.constant 0 : i32
    %c0_i32_1 = arith.constant 0 : i32
    return %c0_i32, %c0_i32_0 : i32, i32
  }
  func.func @transform_3(%arg0: i32, %arg1: i32) -> (i32, i32, i32, i32) {
    %c0_i32 = arith.constant 0 : i32
    %c0_i32_0 = arith.constant 0 : i32
    %c0_i32_1 = arith.constant 0 : i32
    return %arg0, %arg1, %c0_i32, %c0_i32_0 : i32, i32, i32, i32
  }
}

</mosaic_0001>

<llo_original>
// kernel: tpu_custom_call.1
$region0: #{tpu_custom_call.1}
  #allocation0 [shape = 'u32[]', space=smem, size = 0x4, offset = 0x4, fixed_abs, tag = 'smem constant byte address 0x4 - core index']
  #allocation1 [shape = 'u32[144,128]{1,0:T(1,128)}', space=vmem, size = 0x12000, scoped, tag = 'internal scratch']
  %s0 = inlined_call_operand.vmem [shape: bf16[2,18,18,3], index: 0, kind: input, shape index: {}]
  %s1 = inlined_call_operand.vmem [shape: bf16[27,16], index: 1, kind: input, shape index: {}]
  %s2 = inlined_call_operand.vmem [shape: f32[1,16], index: 2, kind: input, shape index: {}]
  %s3 = inlined_call_operand.hbm [shape: bf16[2,16,16,16], index: 3, kind: output, shape index: {}]
  %s4 = sld [smem:[#allocation0]]
  $region45: #{tpu_custom_call.1} parent=0
    _
  %s6 = ssub.s32 1, %s4
  %s7 = scalar_select 0, %s6, %s4
  $region1: #{tpu_custom_call.1} parent=0
    #allocation2 [shape = 'u8[131072]{0}', space=vmem, size = 0x20000, scoped, tag = 'output window, operand 0']
    #allocation3 [shape = 's32[2]{0}', space=sflag, size = 0x8, scoped, tag = 'scoped memory for tpu_custom_call.1']
    %8 = vsyncpa [#allocation3], 0
    %s9 = scalar_lea.sflag [#allocation3], 1
    %10 = vsyncpa %s9, 0
    loop: start=0, step=1, limit=4
    $region2: #{tpu_custom_call.1} parent=1 // loop_pre_header
      _
    $region3: #{tpu_custom_call.1} parent=1 // loop_header
      %s12 = sphi 0, %s16
      %p13 = scmp.ge.s32.totalorder %s12, 4
      %s19 = sphi 0, %s31
      %s20 = sphi 0, %s27
      %s21 = sphi 0, %s19
      %s22 = sphi 0, %s20
      %s23 = sphi 0, %s21
      %s24 = sphi 0, %s22
      %s34 = sphi 0, %s36
      %s37 = sphi 0, %s34
      %s38 = sphi 0, %s37
      %s54 = sphi 0, %s38
      %s58 = sphi 0, %s58
      %s60 = sphi 0, %s58
      %s61 = sphi 0, %s60
      %s75 = sphi 0, %s61
      %s79 = sphi 0, %s79
      %s81 = sphi 0, %s79
      %s82 = sphi 0, %s81
      %s96 = sphi 0, %s82
      %s104 = sphi 0, %s106
      %s107 = sphi 0, %s104
      %s108 = sphi 0, %s107
      %s124 = sphi 0, %s108
    $region4: #{tpu_custom_call.1} parent=1 // loop_header_branch
      %15 = sbr.rel (%p13) target = $region8
    $region5: #{tpu_custom_call.1} parent=1 // loop_body
      %s17 = ssub.s32 %s12, 1
      %s18 = ssub.s32 %s12, 2
      %s25 = sadd.s32 1, %s20
      %p26 = scmp.ge.s32.totalorder %s25, 1
      %s27 = scalar_select %p26, 0, %s25
      %s28 = sadd.s32 1, %s19
      %s29 = scalar_select %p26, %s28, %s19
      %p30 = scmp.ge.s32.totalorder %s29, 2
      %s31 = scalar_select %p30, 0, %s29
      %s32 = ssub.s32 %s19, %s31
      %p33 = scmp.eq.s32.totalorder %s32, 0
      %s35 = sadd.s32 %s34, 1
      %s36 = scalar_select %p33, %s34, %s35
      %p39 = pneg %p33
      %p40 = scmp.eq.s32.totalorder %s12, 1
      %p41 = por %p39, %p40
      %p42 = scmp.ne.s32.totalorder %s34, %s37
      %p43 = scmp.eq.s32.totalorder %s12, 0
      %p44 = por %p42, %p43
      %p45 = scmp.ne.s32.totalorder %s34, %s37
      %p46 = scmp.eq.s32.totalorder %s17, 1
      %p47 = por %p45, %p46
      %p48 = scmp.ne.s32.totalorder %s37, %s38
      %p49 = scmp.eq.s32.totalorder %s17, 0
      %p50 = por %p48, %p49
      %p51 = scmp.ne.s32.totalorder %s37, %s38
      %p52 = scmp.eq.s32.totalorder %s18, 1
      %p53 = por %p51, %p52
      %p55 = scmp.ne.s32.totalorder %s38, %s54
      %p56 = scmp.eq.s32.totalorder %s18, 0
      %p57 = por %p55, %p56
      %s59 = sadd.s32 %s58, 1
      %p62 = scmp.eq.s32.totalorder %s12, 1
      %p63 = scmp.ne.s32.totalorder %s58, %s60
      %p64 = scmp.eq.s32.totalorder %s12, 0
      %p65 = por %p63, %p64
      %p66 = scmp.ne.s32.totalorder %s58, %s60
      %p67 = scmp.eq.s32.totalorder %s17, 1
      %p68 = por %p66, %p67
      %p69 = scmp.ne.s32.totalorder %s60, %s61
      %p70 = scmp.eq.s32.totalorder %s17, 0
      %p71 = por %p69, %p70
      %p72 = scmp.ne.s32.totalorder %s60, %s61
      %p73 = scmp.eq.s32.totalorder %s18, 1
      %p74 = por %p72, %p73
      %p76 = scmp.ne.s32.totalorder %s61, %s75
      %p77 = scmp.eq.s32.totalorder %s18, 0
      %p78 = por %p76, %p77
      %s80 = sadd.s32 %s79, 1
      %p83 = scmp.eq.s32.totalorder %s12, 1
      %p84 = scmp.ne.s32.totalorder %s79, %s81
      %p85 = scmp.eq.s32.totalorder %s12, 0
      %p86 = por %p84, %p85
      %p87 = scmp.ne.s32.totalorder %s79, %s81
      %p88 = scmp.eq.s32.totalorder %s17, 1
      %p89 = por %p87, %p88
      %p90 = scmp.ne.s32.totalorder %s81, %s82
      %p91 = scmp.eq.s32.totalorder %s17, 0
      %p92 = por %p90, %p91
      %p93 = scmp.ne.s32.totalorder %s81, %s82
      %p94 = scmp.eq.s32.totalorder %s18, 1
      %p95 = por %p93, %p94
      %p97 = scmp.ne.s32.totalorder %s82, %s96
      %p98 = scmp.eq.s32.totalorder %s18, 0
      %p99 = por %p97, %p98
      %s100 = ssub.s32 %s19, %s31
      %s101 = ssub.s32 %s20, %s27
      %s102 = sor.u32 %s100, %s101
      %p103 = scmp.eq.s32.totalorder %s102, 0
      %s105 = sadd.s32 %s104, 1
      %s106 = scalar_select %p103, %s104, %s105
      %p109 = pneg %p103
      %p110 = scmp.eq.s32.totalorder %s12, 1
      %p111 = por %p109, %p110
      %p112 = scmp.ne.s32.totalorder %s104, %s107
      %p113 = scmp.eq.s32.totalorder %s12, 0
      %p114 = por %p112, %p113
      %p115 = scmp.ne.s32.totalorder %s104, %s107
      %p116 = scmp.eq.s32.totalorder %s17, 1
      %p117 = por %p115, %p116
      %p118 = scmp.ne.s32.totalorder %s107, %s108
      %p119 = scmp.eq.s32.totalorder %s17, 0
      %p120 = por %p118, %p119
      %p121 = scmp.ne.s32.totalorder %s107, %s108
      %p122 = scmp.eq.s32.totalorder %s18, 1
      %p123 = por %p121, %p122
      %p125 = scmp.ne.s32.totalorder %s108, %s124
      %p126 = scmp.eq.s32.totalorder %s18, 0
      %p127 = por %p125, %p126
      %p128 = scmp.le.s32.totalorder 1, %s12
      %p129 = scmp.lt.s32.totalorder %s12, 3
      %p130 = pnand %p128, %p129
      %p131 = pneg %p130
      // Predicated region
      $region9: #{tpu_custom_call.1} parent=5 // pred_check
        _
      $region10: #{tpu_custom_call.1} parent=5 // pred_check_branch
        %133 = sbr.rel (%p130) target = $region12
      $region11: #{tpu_custom_call.1} parent=5 // pred_region
        %s134 = ssub.s32 %s12, 1
        // Predicated region
        $region13: #{tpu_custom_call.1} parent=11 // pred_check
          %p135 = pneg %p71
        $region14: #{tpu_custom_call.1} parent=11 // pred_check_branch
          %137 = sbr.rel (%p135) target = $region16
        $region15: #{tpu_custom_call.1} parent=11 // pred_region
          _
        $region16: #{tpu_custom_call.1} parent=11 // pred_fallthru
          _
        // Predicated region
        $region17: #{tpu_custom_call.1} parent=11 // pred_check
          %p138 = pneg %p92
        $region18: #{tpu_custom_call.1} parent=11 // pred_check_branch
          %140 = sbr.rel (%p138) target = $region20
        $region19: #{tpu_custom_call.1} parent=11 // pred_region
          _
        $region20: #{tpu_custom_call.1} parent=11 // pred_fallthru
          _
      $region12: #{tpu_custom_call.1} parent=5 // pred_fallthru
        _
      %p141 = scmp.lt.s32.totalorder %s12, 2
      // Predicated region
      $region21: #{tpu_custom_call.1} parent=5 // pred_check
        %p142 = pneg %p141
      $region22: #{tpu_custom_call.1} parent=5 // pred_check_branch
        %144 = sbr.rel (%p142) target = $region24
      $region23: #{tpu_custom_call.1} parent=5 // pred_region
        // Predicated region
        $region25: #{tpu_custom_call.1} parent=23 // pred_check
          %p145 = pneg %p44
        $region26: #{tpu_custom_call.1} parent=23 // pred_check_branch
          %147 = sbr.rel (%p145) target = $region28
        $region27: #{tpu_custom_call.1} parent=23 // pred_region
          %p148 = scmp.lt.s32.totalorder %s19, 1
          %s149 = scalar_select %p148, %s19, 1
          %s150 = smul.addr %s149, 54
          %s151 = smul.addr %s150, 4
          %s152 = scalar_lea.vmem %s0, %s151
        $region28: #{tpu_custom_call.1} parent=23 // pred_fallthru
          _
      $region24: #{tpu_custom_call.1} parent=5 // pred_fallthru
        _
      %p153 = scmp.le.s32.totalorder 1, %s12
      %p154 = scmp.lt.s32.totalorder %s12, 3
      %p155 = pnand %p153, %p154
      %p156 = pneg %p155
      // Predicated region
      $region29: #{tpu_custom_call.1} parent=5 // pred_check
        _
      $region30: #{tpu_custom_call.1} parent=5 // pred_check_branch
        %158 = sbr.rel (%p155) target = $region32
      $region31: #{tpu_custom_call.1} parent=5 // pred_region
        %s159 = ssub.s32 %s12, 1
        %p160 = scmp.lt.s32.totalorder %s21, 1
        %s161 = scalar_select %p160, %s21, 1
        %s162 = smul.addr %s161, 54
        %s163 = smul.addr %s162, 4
        %s164 = scalar_lea.vmem %s0, %s163
        %p165 = pneg %p50
        %p166 = pneg %p47
        %p167 = pneg %p71
        %p168 = pneg %p68
        %p169 = pneg %p92
        %p170 = pneg %p89
        %p171 = pneg %p120
        %p172 = pneg %p117
        %s173 = sand.u32 %s107, 1
        %s174 = scalar_lea.sflag [#allocation3], %s173
        %s175 = sand.u32 %s107, 1
        %s176 = smul.addr %s175, 128
        %s177 = scalar_lea.vmem [#allocation2], %s176
        %p178 = scmp.lt.s32.totalorder %s21, 1
        %s179 = scalar_select %p178, %s21, 1
        %s180 = smul.addr %s179, 54
        %s181 = smul.addr %s180, 4
        %s182 = scalar_lea.vmem %s0, %s181
        %s183 = smul.u32 16, %s22
        %v185 = vld [vmem:[%s182] sm:$0xf]
        %v186 = vld [vmem:[%s182 + $0x4] sm:$0xf]
        %v187 = vld [vmem:[%s182 + $0xc] sm:$0xf]
        %v188 = vld [vmem:[%s182 + $0x10] sm:$0xf]
        %v189 = vld [vmem:[%s182 + $0x18] sm:$0xf]
        %v190 = vld [vmem:[%s182 + $0x1c] sm:$0xf]
        %v191 = vld [vmem:[%s182 + $0x24] sm:$0xf]
        %v192 = vld [vmem:[%s182 + $0x28] sm:$0xf]
        %v193 = vld [vmem:[%s182 + $0x30] sm:$0xf]
        %v194 = vld [vmem:[%s182 + $0x34] sm:$0xf]
        %v195 = vld [vmem:[%s182 + $0x3c] sm:$0xf]
        %v196 = vld [vmem:[%s182 + $0x40] sm:$0xf]
        %v197 = vld [vmem:[%s182 + $0x48] sm:$0xf]
        %v198 = vld [vmem:[%s182 + $0x4c] sm:$0xf]
        %v199 = vld [vmem:[%s182 + $0x54] sm:$0xf]
        %v200 = vld [vmem:[%s182 + $0x58] sm:$0xf]
        %v201 = vld [vmem:[%s182 + $0x60] sm:$0xf]
        %v202 = vld [vmem:[%s182 + $0x64] sm:$0xf]
        %v203 = vld [vmem:[%s182 + $0x6c] sm:$0xf]
        %v204 = vld [vmem:[%s182 + $0x70] sm:$0xf]
        %v205 = vld [vmem:[%s182 + $0x78] sm:$0xf]
        %v206 = vld [vmem:[%s182 + $0x7c] sm:$0xf]
        %v207 = vld [vmem:[%s182 + $0x84] sm:$0xf]
        %v208 = vld [vmem:[%s182 + $0x88] sm:$0xf]
        %v209 = vld [vmem:[%s182 + $0x90] sm:$0xf]
        %v210 = vld [vmem:[%s182 + $0x94] sm:$0xf]
        %v211 = vld [vmem:[%s182 + $0x9c] sm:$0xf]
        %v212 = vld [vmem:[%s182 + $0xa0] sm:$0xf]
        %v213 = vld [vmem:[%s182 + $0xa8] sm:$0xf]
        %v214 = vld [vmem:[%s182 + $0xac] sm:$0xf]
        %v215 = vld [vmem:[%s182 + $0xb4] sm:$0xf]
        %v216 = vld [vmem:[%s182 + $0xb8] sm:$0xf]
        %v217 = vld [vmem:[%s182 + $0x8] sm:$0x1]
        %v218 = vld [vmem:[%s182 + $0x14] sm:$0x1]
        %v219 = vld [vmem:[%s182 + $0x20] sm:$0x1]
        %v220 = vld [vmem:[%s182 + $0x2c] sm:$0x1]
        %v221 = vld [vmem:[%s182 + $0x38] sm:$0x1]
        %v222 = vld [vmem:[%s182 + $0x44] sm:$0x1]
        %v223 = vld [vmem:[%s182 + $0x50] sm:$0x1]
        %v224 = vld [vmem:[%s182 + $0x5c] sm:$0x1]
        %v225 = vld [vmem:[%s182 + $0x68] sm:$0x1]
        %v226 = vld [vmem:[%s182 + $0x74] sm:$0x1]
        %v227 = vld [vmem:[%s182 + $0x80] sm:$0x1]
        %v228 = vld [vmem:[%s182 + $0x8c] sm:$0x1]
        %v229 = vld [vmem:[%s182 + $0x98] sm:$0x1]
        %v230 = vld [vmem:[%s182 + $0xa4] sm:$0x1]
        %v231 = vld [vmem:[%s182 + $0xb0] sm:$0x1]
        %v232 = vld [vmem:[%s182 + $0xbc] sm:$0x1]
        %vm233 = vsmask.f32 3328
        %vm234 = vsmask.f32 7440
        %vm235 = vmor %vm233, %vm234
        %v237 = vshrl.u32 %v185, 16
        %v239 = vrot.slane %v237, 4
        %v240 = vshll.u32 %v185, 16
        %v242 = vrot.slane %v240, 5
        %v243 = vor.u32 %v239, %v242
        %v244 = vrot.slane %v243, 4
        %v246 = vshll.u32 %v186, 16
        %v248 = vrot.slane %v246, 5
        %v249 = vsel %vm235, %v244, %v248
        %v250 = vshrl.u32 %v186, 16
        %v252 = vrot.slane %v250, 4
        %v253 = vor.u32 %v252, %v248
        %v254 = vrot.slane %v253, 4
        %v256 = vshll.u32 %v217, 16
        %v258 = vrot.slane %v256, 5
        %v259 = vsel %vm235, %v254, %v258
        %v261 = vshrl.u32 %v187, 16
        %v263 = vrot.slane %v261, 4
        %v264 = vshll.u32 %v187, 16
        %v266 = vrot.slane %v264, 5
        %v267 = vor.u32 %v263, %v266
        %v268 = vrot.slane %v267, 4
        %v270 = vshll.u32 %v188, 16
        %v272 = vrot.slane %v270, 5
        %v273 = vsel %vm235, %v268, %v272
        %v274 = vshrl.u32 %v188, 16
        %v276 = vrot.slane %v274, 4
        %v277 = vor.u32 %v276, %v272
        %v278 = vrot.slane %v277, 4
        %v280 = vshll.u32 %v218, 16
        %v282 = vrot.slane %v280, 5
        %v283 = vsel %vm235, %v278, %v282
        %v285 = vshrl.u32 %v189, 16
        %v287 = vrot.slane %v285, 4
        %v288 = vshll.u32 %v189, 16
        %v290 = vrot.slane %v288, 5
        %v291 = vor.u32 %v287, %v290
        %v292 = vrot.slane %v291, 4
        %v294 = vshll.u32 %v190, 16
        %v296 = vrot.slane %v294, 5
        %v297 = vsel %vm235, %v292, %v296
        %v298 = vshrl.u32 %v190, 16
        %v300 = vrot.slane %v298, 4
        %v301 = vor.u32 %v300, %v296
        %v302 = vrot.slane %v301, 4
        %v304 = vshll.u32 %v219, 16
        %v306 = vrot.slane %v304, 5
        %v307 = vsel %vm235, %v302, %v306
        %v309 = vshrl.u32 %v191, 16
        %v311 = vrot.slane %v309, 4
        %v312 = vshll.u32 %v191, 16
        %v314 = vrot.slane %v312, 5
        %v315 = vor.u32 %v311, %v314
        %v316 = vrot.slane %v315, 4
        %v318 = vshll.u32 %v192, 16
        %v320 = vrot.slane %v318, 5
        %v321 = vsel %vm235, %v316, %v320
        %v322 = vshrl.u32 %v192, 16
        %v324 = vrot.slane %v322, 4
        %v325 = vor.u32 %v324, %v320
        %v326 = vrot.slane %v325, 4
        %v328 = vshll.u32 %v220, 16
        %v330 = vrot.slane %v328, 5
        %v331 = vsel %vm235, %v326, %v330
        %v333 = vshrl.u32 %v193, 16
        %v335 = vrot.slane %v333, 4
        %v336 = vshll.u32 %v193, 16
        %v338 = vrot.slane %v336, 5
        %v339 = vor.u32 %v335, %v338
        %v340 = vrot.slane %v339, 4
        %v342 = vshll.u32 %v194, 16
        %v344 = vrot.slane %v342, 5
        %v345 = vsel %vm235, %v340, %v344
        %v346 = vshrl.u32 %v194, 16
        %v348 = vrot.slane %v346, 4
        %v349 = vor.u32 %v348, %v344
        %v350 = vrot.slane %v349, 4
        %v352 = vshll.u32 %v221, 16
        %v354 = vrot.slane %v352, 5
        %v355 = vsel %vm235, %v350, %v354
        %v357 = vshrl.u32 %v195, 16
        %v359 = vrot.slane %v357, 4
        %v360 = vshll.u32 %v195, 16
        %v362 = vrot.slane %v360, 5
        %v363 = vor.u32 %v359, %v362
        %v364 = vrot.slane %v363, 4
        %v366 = vshll.u32 %v196, 16
        %v368 = vrot.slane %v366, 5
        %v369 = vsel %vm235, %v364, %v368
        %v370 = vshrl.u32 %v196, 16
        %v372 = vrot.slane %v370, 4
        %v373 = vor.u32 %v372, %v368
        %v374 = vrot.slane %v373, 4
        %v376 = vshll.u32 %v222, 16
        %v378 = vrot.slane %v376, 5
        %v379 = vsel %vm235, %v374, %v378
        %v381 = vshrl.u32 %v197, 16
        %v383 = vrot.slane %v381, 4
        %v384 = vshll.u32 %v197, 16
        %v386 = vrot.slane %v384, 5
        %v387 = vor.u32 %v383, %v386
        %v388 = vrot.slane %v387, 4
        %v390 = vshll.u32 %v198, 16
        %v392 = vrot.slane %v390, 5
        %v393 = vsel %vm235, %v388, %v392
        %v394 = vshrl.u32 %v198, 16
        %v396 = vrot.slane %v394, 4
        %v397 = vor.u32 %v396, %v392
        %v398 = vrot.slane %v397, 4
        %v400 = vshll.u32 %v223, 16
        %v402 = vrot.slane %v400, 5
        %v403 = vsel %vm235, %v398, %v402
        %v405 = vshrl.u32 %v199, 16
        %v407 = vrot.slane %v405, 4
        %v408 = vshll.u32 %v199, 16
        %v410 = vrot.slane %v408, 5
        %v411 = vor.u32 %v407, %v410
        %v412 = vrot.slane %v411, 4
        %v414 = vshll.u32 %v200, 16
        %v416 = vrot.slane %v414, 5
        %v417 = vsel %vm235, %v412, %v416
        %v418 = vshrl.u32 %v200, 16
        %v420 = vrot.slane %v418, 4
        %v421 = vor.u32 %v420, %v416
        %v422 = vrot.slane %v421, 4
        %v424 = vshll.u32 %v224, 16
        %v426 = vrot.slane %v424, 5
        %v427 = vsel %vm235, %v422, %v426
        %v429 = vshrl.u32 %v201, 16
        %v431 = vrot.slane %v429, 4
        %v432 = vshll.u32 %v201, 16
        %v434 = vrot.slane %v432, 5
        %v435 = vor.u32 %v431, %v434
        %v436 = vrot.slane %v435, 4
        %v438 = vshll.u32 %v202, 16
        %v440 = vrot.slane %v438, 5
        %v441 = vsel %vm235, %v436, %v440
        %v442 = vshrl.u32 %v202, 16
        %v444 = vrot.slane %v442, 4
        %v445 = vor.u32 %v444, %v440
        %v446 = vrot.slane %v445, 4
        %v448 = vshll.u32 %v225, 16
        %v450 = vrot.slane %v448, 5
        %v451 = vsel %vm235, %v446, %v450
        %v453 = vshrl.u32 %v203, 16
        %v455 = vrot.slane %v453, 4
        %v456 = vshll.u32 %v203, 16
        %v458 = vrot.slane %v456, 5
        %v459 = vor.u32 %v455, %v458
        %v460 = vrot.slane %v459, 4
        %v462 = vshll.u32 %v204, 16
        %v464 = vrot.slane %v462, 5
        %v465 = vsel %vm235, %v460, %v464
        %v466 = vshrl.u32 %v204, 16
        %v468 = vrot.slane %v466, 4
        %v469 = vor.u32 %v468, %v464
        %v470 = vrot.slane %v469, 4
        %v472 = vshll.u32 %v226, 16
        %v474 = vrot.slane %v472, 5
        %v475 = vsel %vm235, %v470, %v474
        %v477 = vshrl.u32 %v205, 16
        %v479 = vrot.slane %v477, 4
        %v480 = vshll.u32 %v205, 16
        %v482 = vrot.slane %v480, 5
        %v483 = vor.u32 %v479, %v482
        %v484 = vrot.slane %v483, 4
        %v486 = vshll.u32 %v206, 16
        %v488 = vrot.slane %v486, 5
        %v489 = vsel %vm235, %v484, %v488
        %v490 = vshrl.u32 %v206, 16
        %v492 = vrot.slane %v490, 4
        %v493 = vor.u32 %v492, %v488
        %v494 = vrot.slane %v493, 4
        %v496 = vshll.u32 %v227, 16
        %v498 = vrot.slane %v496, 5
        %v499 = vsel %vm235, %v494, %v498
        %v501 = vshrl.u32 %v207, 16
        %v503 = vrot.slane %v501, 4
        %v504 = vshll.u32 %v207, 16
        %v506 = vrot.slane %v504, 5
        %v507 = vor.u32 %v503, %v506
        %v508 = vrot.slane %v507, 4
        %v510 = vshll.u32 %v208, 16
        %v512 = vrot.slane %v510, 5
        %v513 = vsel %vm235, %v508, %v512
        %v514 = vshrl.u32 %v208, 16
        %v516 = vrot.slane %v514, 4
        %v517 = vor.u32 %v516, %v512
        %v518 = vrot.slane %v517, 4
        %v520 = vshll.u32 %v228, 16
        %v522 = vrot.slane %v520, 5
        %v523 = vsel %vm235, %v518, %v522
        %v525 = vshrl.u32 %v209, 16
        %v527 = vrot.slane %v525, 4
        %v528 = vshll.u32 %v209, 16
        %v530 = vrot.slane %v528, 5
        %v531 = vor.u32 %v527, %v530
        %v532 = vrot.slane %v531, 4
        %v534 = vshll.u32 %v210, 16
        %v536 = vrot.slane %v534, 5
        %v537 = vsel %vm235, %v532, %v536
        %v538 = vshrl.u32 %v210, 16
        %v540 = vrot.slane %v538, 4
        %v541 = vor.u32 %v540, %v536
        %v542 = vrot.slane %v541, 4
        %v544 = vshll.u32 %v229, 16
        %v546 = vrot.slane %v544, 5
        %v547 = vsel %vm235, %v542, %v546
        %v549 = vshrl.u32 %v211, 16
        %v551 = vrot.slane %v549, 4
        %v552 = vshll.u32 %v211, 16
        %v554 = vrot.slane %v552, 5
        %v555 = vor.u32 %v551, %v554
        %v556 = vrot.slane %v555, 4
        %v558 = vshll.u32 %v212, 16
        %v560 = vrot.slane %v558, 5
        %v561 = vsel %vm235, %v556, %v560
        %v562 = vshrl.u32 %v212, 16
        %v564 = vrot.slane %v562, 4
        %v565 = vor.u32 %v564, %v560
        %v566 = vrot.slane %v565, 4
        %v568 = vshll.u32 %v230, 16
        %v570 = vrot.slane %v568, 5
        %v571 = vsel %vm235, %v566, %v570
        %v573 = vshrl.u32 %v213, 16
        %v575 = vrot.slane %v573, 4
        %v576 = vshll.u32 %v213, 16
        %v578 = vrot.slane %v576, 5
        %v579 = vor.u32 %v575, %v578
        %v580 = vrot.slane %v579, 4
        %v582 = vshll.u32 %v214, 16
        %v584 = vrot.slane %v582, 5
        %v585 = vsel %vm235, %v580, %v584
        %v586 = vshrl.u32 %v214, 16
        %v588 = vrot.slane %v586, 4
        %v589 = vor.u32 %v588, %v584
        %v590 = vrot.slane %v589, 4
        %v592 = vshll.u32 %v231, 16
        %v594 = vrot.slane %v592, 5
        %v595 = vsel %vm235, %v590, %v594
        %v597 = vshrl.u32 %v215, 16
        %v599 = vrot.slane %v597, 4
        %v600 = vshll.u32 %v215, 16
        %v602 = vrot.slane %v600, 5
        %v603 = vor.u32 %v599, %v602
        %v604 = vrot.slane %v603, 4
        %v606 = vshll.u32 %v216, 16
        %v608 = vrot.slane %v606, 5
        %v609 = vsel %vm235, %v604, %v608
        %v610 = vshrl.u32 %v216, 16
        %v612 = vrot.slane %v610, 4
        %v613 = vor.u32 %v612, %v608
        %v614 = vrot.slane %v613, 4
        %v616 = vshll.u32 %v232, 16
        %v618 = vrot.slane %v616, 5
        %v619 = vsel %vm235, %v614, %v618
        %v620 = vld [vmem:[%s182] sm:$0xe]
        %v621 = vld [vmem:[%s182 + $0xc] sm:$0xe]
        %v622 = vld [vmem:[%s182 + $0x18] sm:$0xe]
        %v623 = vld [vmem:[%s182 + $0x24] sm:$0xe]
        %v624 = vld [vmem:[%s182 + $0x30] sm:$0xe]
        %v625 = vld [vmem:[%s182 + $0x3c] sm:$0xe]
        %v626 = vld [vmem:[%s182 + $0x48] sm:$0xe]
        %v627 = vld [vmem:[%s182 + $0x54] sm:$0xe]
        %v628 = vld [vmem:[%s182 + $0x60] sm:$0xe]
        %v629 = vld [vmem:[%s182 + $0x6c] sm:$0xe]
        %v630 = vld [vmem:[%s182 + $0x78] sm:$0xe]
        %v631 = vld [vmem:[%s182 + $0x84] sm:$0xe]
        %v632 = vld [vmem:[%s182 + $0x90] sm:$0xe]
        %v633 = vld [vmem:[%s182 + $0x9c] sm:$0xe]
        %v634 = vld [vmem:[%s182 + $0xa8] sm:$0xe]
        %v635 = vld [vmem:[%s182 + $0xb4] sm:$0xe]
        %vm684 = vcmask 1042432
        %vm685 = vcmask 1046532
        %vm686 = vmor %vm684, %vm685
        %v687 = vrot.slane %v620, 5
        %v688 = vrot.slane %v687, 4
        %v689 = vrot.slane %v186, 5
        %v690 = vsel %vm686, %v688, %v689
        %v691 = vrot.slane %v689, 4
        %v692 = vrot.slane %v217, 5
        %v693 = vsel %vm686, %v691, %v692
        %v694 = vrot.slane %v621, 5
        %v695 = vrot.slane %v694, 4
        %v696 = vrot.slane %v188, 5
        %v697 = vsel %vm686, %v695, %v696
        %v698 = vrot.slane %v696, 4
        %v699 = vrot.slane %v218, 5
        %v700 = vsel %vm686, %v698, %v699
        %v701 = vrot.slane %v622, 5
        %v702 = vrot.slane %v701, 4
        %v703 = vrot.slane %v190, 5
        %v704 = vsel %vm686, %v702, %v703
        %v705 = vrot.slane %v703, 4
        %v706 = vrot.slane %v219, 5
        %v707 = vsel %vm686, %v705, %v706
        %v708 = vrot.slane %v623, 5
        %v709 = vrot.slane %v708, 4
        %v710 = vrot.slane %v192, 5
        %v711 = vsel %vm686, %v709, %v710
        %v712 = vrot.slane %v710, 4
        %v713 = vrot.slane %v220, 5
        %v714 = vsel %vm686, %v712, %v713
        %v715 = vrot.slane %v624, 5
        %v716 = vrot.slane %v715, 4
        %v717 = vrot.slane %v194, 5
        %v718 = vsel %vm686, %v716, %v717
        %v719 = vrot.slane %v717, 4
        %v720 = vrot.slane %v221, 5
        %v721 = vsel %vm686, %v719, %v720
        %v722 = vrot.slane %v625, 5
        %v723 = vrot.slane %v722, 4
        %v724 = vrot.slane %v196, 5
        %v725 = vsel %vm686, %v723, %v724
        %v726 = vrot.slane %v724, 4
        %v727 = vrot.slane %v222, 5
        %v728 = vsel %vm686, %v726, %v727
        %v729 = vrot.slane %v626, 5
        %v730 = vrot.slane %v729, 4
        %v731 = vrot.slane %v198, 5
        %v732 = vsel %vm686, %v730, %v731
        %v733 = vrot.slane %v731, 4
        %v734 = vrot.slane %v223, 5
        %v735 = vsel %vm686, %v733, %v734
        %v736 = vrot.slane %v627, 5
        %v737 = vrot.slane %v736, 4
        %v738 = vrot.slane %v200, 5
        %v739 = vsel %vm686, %v737, %v738
        %v740 = vrot.slane %v738, 4
        %v741 = vrot.slane %v224, 5
        %v742 = vsel %vm686, %v740, %v741
        %v743 = vrot.slane %v628, 5
        %v744 = vrot.slane %v743, 4
        %v745 = vrot.slane %v202, 5
        %v746 = vsel %vm686, %v744, %v745
        %v747 = vrot.slane %v745, 4
        %v748 = vrot.slane %v225, 5
        %v749 = vsel %vm686, %v747, %v748
        %v750 = vrot.slane %v629, 5
        %v751 = vrot.slane %v750, 4
        %v752 = vrot.slane %v204, 5
        %v753 = vsel %vm686, %v751, %v752
        %v754 = vrot.slane %v752, 4
        %v755 = vrot.slane %v226, 5
        %v756 = vsel %vm686, %v754, %v755
        %v757 = vrot.slane %v630, 5
        %v758 = vrot.slane %v757, 4
        %v759 = vrot.slane %v206, 5
        %v760 = vsel %vm686, %v758, %v759
        %v761 = vrot.slane %v759, 4
        %v762 = vrot.slane %v227, 5
        %v763 = vsel %vm686, %v761, %v762
        %v764 = vrot.slane %v631, 5
        %v765 = vrot.slane %v764, 4
        %v766 = vrot.slane %v208, 5
        %v767 = vsel %vm686, %v765, %v766
        %v768 = vrot.slane %v766, 4
        %v769 = vrot.slane %v228, 5
        %v770 = vsel %vm686, %v768, %v769
        %v771 = vrot.slane %v632, 5
        %v772 = vrot.slane %v771, 4
        %v773 = vrot.slane %v210, 5
        %v774 = vsel %vm686, %v772, %v773
        %v775 = vrot.slane %v773, 4
        %v776 = vrot.slane %v229, 5
        %v777 = vsel %vm686, %v775, %v776
        %v778 = vrot.slane %v633, 5
        %v779 = vrot.slane %v778, 4
        %v780 = vrot.slane %v212, 5
        %v781 = vsel %vm686, %v779, %v780
        %v782 = vrot.slane %v780, 4
        %v783 = vrot.slane %v230, 5
        %v784 = vsel %vm686, %v782, %v783
        %v785 = vrot.slane %v634, 5
        %v786 = vrot.slane %v785, 4
        %v787 = vrot.slane %v214, 5
        %v788 = vsel %vm686, %v786, %v787
        %v789 = vrot.slane %v787, 4
        %v790 = vrot.slane %v231, 5
        %v791 = vsel %vm686, %v789, %v790
        %v792 = vrot.slane %v635, 5
        %v793 = vrot.slane %v792, 4
        %v794 = vrot.slane %v216, 5
        %v795 = vsel %vm686, %v793, %v794
        %v796 = vrot.slane %v794, 4
        %v797 = vrot.slane %v232, 5
        %v798 = vsel %vm686, %v796, %v797
        %s799 = scalar_lea.vmem %s182, 12
        %v800 = vld [vmem:[%s799] sm:$0xf]
        %v801 = vld [vmem:[%s799 + $0x4] sm:$0xf]
        %v802 = vld [vmem:[%s799 + $0xc] sm:$0xf]
        %v803 = vld [vmem:[%s799 + $0x10] sm:$0xf]
        %v804 = vld [vmem:[%s799 + $0x18] sm:$0xf]
        %v805 = vld [vmem:[%s799 + $0x1c] sm:$0xf]
        %v806 = vld [vmem:[%s799 + $0x24] sm:$0xf]
        %v807 = vld [vmem:[%s799 + $0x28] sm:$0xf]
        %v808 = vld [vmem:[%s799 + $0x30] sm:$0xf]
        %v809 = vld [vmem:[%s799 + $0x34] sm:$0xf]
        %v810 = vld [vmem:[%s799 + $0x3c] sm:$0xf]
        %v811 = vld [vmem:[%s799 + $0x40] sm:$0xf]
        %v812 = vld [vmem:[%s799 + $0x48] sm:$0xf]
        %v813 = vld [vmem:[%s799 + $0x4c] sm:$0xf]
        %v814 = vld [vmem:[%s799 + $0x54] sm:$0xf]
        %v815 = vld [vmem:[%s799 + $0x58] sm:$0xf]
        %v816 = vld [vmem:[%s799 + $0x60] sm:$0xf]
        %v817 = vld [vmem:[%s799 + $0x64] sm:$0xf]
        %v818 = vld [vmem:[%s799 + $0x6c] sm:$0xf]
        %v819 = vld [vmem:[%s799 + $0x70] sm:$0xf]
        %v820 = vld [vmem:[%s799 + $0x78] sm:$0xf]
        %v821 = vld [vmem:[%s799 + $0x7c] sm:$0xf]
        %v822 = vld [vmem:[%s799 + $0x84] sm:$0xf]
        %v823 = vld [vmem:[%s799 + $0x88] sm:$0xf]
        %v824 = vld [vmem:[%s799 + $0x90] sm:$0xf]
        %v825 = vld [vmem:[%s799 + $0x94] sm:$0xf]
        %v826 = vld [vmem:[%s799 + $0x9c] sm:$0xf]
        %v827 = vld [vmem:[%s799 + $0xa0] sm:$0xf]
        %v828 = vld [vmem:[%s799 + $0xa8] sm:$0xf]
        %v829 = vld [vmem:[%s799 + $0xac] sm:$0xf]
        %v830 = vld [vmem:[%s799 + $0xb4] sm:$0xf]
        %v831 = vld [vmem:[%s799 + $0xb8] sm:$0xf]
        %v832 = vld [vmem:[%s799 + $0x8] sm:$0x1]
        %v833 = vld [vmem:[%s799 + $0x14] sm:$0x1]
        %v834 = vld [vmem:[%s799 + $0x20] sm:$0x1]
        %v835 = vld [vmem:[%s799 + $0x2c] sm:$0x1]
        %v836 = vld [vmem:[%s799 + $0x38] sm:$0x1]
        %v837 = vld [vmem:[%s799 + $0x44] sm:$0x1]
        %v838 = vld [vmem:[%s799 + $0x50] sm:$0x1]
        %v839 = vld [vmem:[%s799 + $0x5c] sm:$0x1]
        %v840 = vld [vmem:[%s799 + $0x68] sm:$0x1]
        %v841 = vld [vmem:[%s799 + $0x74] sm:$0x1]
        %v842 = vld [vmem:[%s799 + $0x80] sm:$0x1]
        %v843 = vld [vmem:[%s799 + $0x8c] sm:$0x1]
        %v844 = vld [vmem:[%s799 + $0x98] sm:$0x1]
        %v845 = vld [vmem:[%s799 + $0xa4] sm:$0x1]
        %v846 = vld [vmem:[%s799 + $0xb0] sm:$0x1]
        %v847 = vld [vmem:[%s799 + $0xbc] sm:$0x1]
        %v849 = vshrl.u32 %v800, 16
        %v851 = vrot.slane %v849, 4
        %v852 = vshll.u32 %v800, 16
        %v854 = vrot.slane %v852, 5
        %v855 = vor.u32 %v851, %v854
        %v856 = vrot.slane %v855, 4
        %v858 = vshll.u32 %v801, 16
        %v860 = vrot.slane %v858, 5
        %v861 = vsel %vm235, %v856, %v860
        %v862 = vshrl.u32 %v801, 16
        %v864 = vrot.slane %v862, 4
        %v865 = vor.u32 %v864, %v860
        %v866 = vrot.slane %v865, 4
        %v868 = vshll.u32 %v832, 16
        %v870 = vrot.slane %v868, 5
        %v871 = vsel %vm235, %v866, %v870
        %v873 = vshrl.u32 %v802, 16
        %v875 = vrot.slane %v873, 4
        %v876 = vshll.u32 %v802, 16
        %v878 = vrot.slane %v876, 5
        %v879 = vor.u32 %v875, %v878
        %v880 = vrot.slane %v879, 4
        %v882 = vshll.u32 %v803, 16
        %v884 = vrot.slane %v882, 5
        %v885 = vsel %vm235, %v880, %v884
        %v886 = vshrl.u32 %v803, 16
        %v888 = vrot.slane %v886, 4
        %v889 = vor.u32 %v888, %v884
        %v890 = vrot.slane %v889, 4
        %v892 = vshll.u32 %v833, 16
        %v894 = vrot.slane %v892, 5
        %v895 = vsel %vm235, %v890, %v894
        %v897 = vshrl.u32 %v804, 16
        %v899 = vrot.slane %v897, 4
        %v900 = vshll.u32 %v804, 16
        %v902 = vrot.slane %v900, 5
        %v903 = vor.u32 %v899, %v902
        %v904 = vrot.slane %v903, 4
        %v906 = vshll.u32 %v805, 16
        %v908 = vrot.slane %v906, 5
        %v909 = vsel %vm235, %v904, %v908
        %v910 = vshrl.u32 %v805, 16
        %v912 = vrot.slane %v910, 4
        %v913 = vor.u32 %v912, %v908
        %v914 = vrot.slane %v913, 4
        %v916 = vshll.u32 %v834, 16
        %v918 = vrot.slane %v916, 5
        %v919 = vsel %vm235, %v914, %v918
        %v921 = vshrl.u32 %v806, 16
        %v923 = vrot.slane %v921, 4
        %v924 = vshll.u32 %v806, 16
        %v926 = vrot.slane %v924, 5
        %v927 = vor.u32 %v923, %v926
        %v928 = vrot.slane %v927, 4
        %v930 = vshll.u32 %v807, 16
        %v932 = vrot.slane %v930, 5
        %v933 = vsel %vm235, %v928, %v932
        %v934 = vshrl.u32 %v807, 16
        %v936 = vrot.slane %v934, 4
        %v937 = vor.u32 %v936, %v932
        %v938 = vrot.slane %v937, 4
        %v940 = vshll.u32 %v835, 16
        %v942 = vrot.slane %v940, 5
        %v943 = vsel %vm235, %v938, %v942
        %v945 = vshrl.u32 %v808, 16
        %v947 = vrot.slane %v945, 4
        %v948 = vshll.u32 %v808, 16
        %v950 = vrot.slane %v948, 5
        %v951 = vor.u32 %v947, %v950
        %v952 = vrot.slane %v951, 4
        %v954 = vshll.u32 %v809, 16
        %v956 = vrot.slane %v954, 5
        %v957 = vsel %vm235, %v952, %v956
        %v958 = vshrl.u32 %v809, 16
        %v960 = vrot.slane %v958, 4
        %v961 = vor.u32 %v960, %v956
        %v962 = vrot.slane %v961, 4
        %v964 = vshll.u32 %v836, 16
        %v966 = vrot.slane %v964, 5
        %v967 = vsel %vm235, %v962, %v966
        %v969 = vshrl.u32 %v810, 16
        %v971 = vrot.slane %v969, 4
        %v972 = vshll.u32 %v810, 16
        %v974 = vrot.slane %v972, 5
        %v975 = vor.u32 %v971, %v974
        %v976 = vrot.slane %v975, 4
        %v978 = vshll.u32 %v811, 16
        %v980 = vrot.slane %v978, 5
        %v981 = vsel %vm235, %v976, %v980
        %v982 = vshrl.u32 %v811, 16
        %v984 = vrot.slane %v982, 4
        %v985 = vor.u32 %v984, %v980
        %v986 = vrot.slane %v985, 4
        %v988 = vshll.u32 %v837, 16
        %v990 = vrot.slane %v988, 5
        %v991 = vsel %vm235, %v986, %v990
        %v993 = vshrl.u32 %v812, 16
        %v995 = vrot.slane %v993, 4
        %v996 = vshll.u32 %v812, 16
        %v998 = vrot.slane %v996, 5
        %v999 = vor.u32 %v995, %v998
        %v1000 = vrot.slane %v999, 4
        %v1002 = vshll.u32 %v813, 16
        %v1004 = vrot.slane %v1002, 5
        %v1005 = vsel %vm235, %v1000, %v1004
        %v1006 = vshrl.u32 %v813, 16
        %v1008 = vrot.slane %v1006, 4
        %v1009 = vor.u32 %v1008, %v1004
        %v1010 = vrot.slane %v1009, 4
        %v1012 = vshll.u32 %v838, 16
        %v1014 = vrot.slane %v1012, 5
        %v1015 = vsel %vm235, %v1010, %v1014
        %v1017 = vshrl.u32 %v814, 16
        %v1019 = vrot.slane %v1017, 4
        %v1020 = vshll.u32 %v814, 16
        %v1022 = vrot.slane %v1020, 5
        %v1023 = vor.u32 %v1019, %v1022
        %v1024 = vrot.slane %v1023, 4
        %v1026 = vshll.u32 %v815, 16
        %v1028 = vrot.slane %v1026, 5
        %v1029 = vsel %vm235, %v1024, %v1028
        %v1030 = vshrl.u32 %v815, 16
        %v1032 = vrot.slane %v1030, 4
        %v1033 = vor.u32 %v1032, %v1028
        %v1034 = vrot.slane %v1033, 4
        %v1036 = vshll.u32 %v839, 16
        %v1038 = vrot.slane %v1036, 5
        %v1039 = vsel %vm235, %v1034, %v1038
        %v1041 = vshrl.u32 %v816, 16
        %v1043 = vrot.slane %v1041, 4
        %v1044 = vshll.u32 %v816, 16
        %v1046 = vrot.slane %v1044, 5
        %v1047 = vor.u32 %v1043, %v1046
        %v1048 = vrot.slane %v1047, 4
        %v1050 = vshll.u32 %v817, 16
        %v1052 = vrot.slane %v1050, 5
        %v1053 = vsel %vm235, %v1048, %v1052
        %v1054 = vshrl.u32 %v817, 16
        %v1056 = vrot.slane %v1054, 4
        %v1057 = vor.u32 %v1056, %v1052
        %v1058 = vrot.slane %v1057, 4
        %v1060 = vshll.u32 %v840, 16
        %v1062 = vrot.slane %v1060, 5
        %v1063 = vsel %vm235, %v1058, %v1062
        %v1065 = vshrl.u32 %v818, 16
        %v1067 = vrot.slane %v1065, 4
        %v1068 = vshll.u32 %v818, 16
        %v1070 = vrot.slane %v1068, 5
        %v1071 = vor.u32 %v1067, %v1070
        %v1072 = vrot.slane %v1071, 4
        %v1074 = vshll.u32 %v819, 16
        %v1076 = vrot.slane %v1074, 5
        %v1077 = vsel %vm235, %v1072, %v1076
        %v1078 = vshrl.u32 %v819, 16
        %v1080 = vrot.slane %v1078, 4
        %v1081 = vor.u32 %v1080, %v1076
        %v1082 = vrot.slane %v1081, 4
        %v1084 = vshll.u32 %v841, 16
        %v1086 = vrot.slane %v1084, 5
        %v1087 = vsel %vm235, %v1082, %v1086
        %v1089 = vshrl.u32 %v820, 16
        %v1091 = vrot.slane %v1089, 4
        %v1092 = vshll.u32 %v820, 16
        %v1094 = vrot.slane %v1092, 5
        %v1095 = vor.u32 %v1091, %v1094
        %v1096 = vrot.slane %v1095, 4
        %v1098 = vshll.u32 %v821, 16
        %v1100 = vrot.slane %v1098, 5
        %v1101 = vsel %vm235, %v1096, %v1100
        %v1102 = vshrl.u32 %v821, 16
        %v1104 = vrot.slane %v1102, 4
        %v1105 = vor.u32 %v1104, %v1100
        %v1106 = vrot.slane %v1105, 4
        %v1108 = vshll.u32 %v842, 16
        %v1110 = vrot.slane %v1108, 5
        %v1111 = vsel %vm235, %v1106, %v1110
        %v1113 = vshrl.u32 %v822, 16
        %v1115 = vrot.slane %v1113, 4
        %v1116 = vshll.u32 %v822, 16
        %v1118 = vrot.slane %v1116, 5
        %v1119 = vor.u32 %v1115, %v1118
        %v1120 = vrot.slane %v1119, 4
        %v1122 = vshll.u32 %v823, 16
        %v1124 = vrot.slane %v1122, 5
        %v1125 = vsel %vm235, %v1120, %v1124
        %v1126 = vshrl.u32 %v823, 16
        %v1128 = vrot.slane %v1126, 4
        %v1129 = vor.u32 %v1128, %v1124
        %v1130 = vrot.slane %v1129, 4
        %v1132 = vshll.u32 %v843, 16
        %v1134 = vrot.slane %v1132, 5
        %v1135 = vsel %vm235, %v1130, %v1134
        %v1137 = vshrl.u32 %v824, 16
        %v1139 = vrot.slane %v1137, 4
        %v1140 = vshll.u32 %v824, 16
        %v1142 = vrot.slane %v1140, 5
        %v1143 = vor.u32 %v1139, %v1142
        %v1144 = vrot.slane %v1143, 4
        %v1146 = vshll.u32 %v825, 16
        %v1148 = vrot.slane %v1146, 5
        %v1149 = vsel %vm235, %v1144, %v1148
        %v1150 = vshrl.u32 %v825, 16
        %v1152 = vrot.slane %v1150, 4
        %v1153 = vor.u32 %v1152, %v1148
        %v1154 = vrot.slane %v1153, 4
        %v1156 = vshll.u32 %v844, 16
        %v1158 = vrot.slane %v1156, 5
        %v1159 = vsel %vm235, %v1154, %v1158
        %v1161 = vshrl.u32 %v826, 16
        %v1163 = vrot.slane %v1161, 4
        %v1164 = vshll.u32 %v826, 16
        %v1166 = vrot.slane %v1164, 5
        %v1167 = vor.u32 %v1163, %v1166
        %v1168 = vrot.slane %v1167, 4
        %v1170 = vshll.u32 %v827, 16
        %v1172 = vrot.slane %v1170, 5
        %v1173 = vsel %vm235, %v1168, %v1172
        %v1174 = vshrl.u32 %v827, 16
        %v1176 = vrot.slane %v1174, 4
        %v1177 = vor.u32 %v1176, %v1172
        %v1178 = vrot.slane %v1177, 4
        %v1180 = vshll.u32 %v845, 16
        %v1182 = vrot.slane %v1180, 5
        %v1183 = vsel %vm235, %v1178, %v1182
        %v1185 = vshrl.u32 %v828, 16
        %v1187 = vrot.slane %v1185, 4
        %v1188 = vshll.u32 %v828, 16
        %v1190 = vrot.slane %v1188, 5
        %v1191 = vor.u32 %v1187, %v1190
        %v1192 = vrot.slane %v1191, 4
        %v1194 = vshll.u32 %v829, 16
        %v1196 = vrot.slane %v1194, 5
        %v1197 = vsel %vm235, %v1192, %v1196
        %v1198 = vshrl.u32 %v829, 16
        %v1200 = vrot.slane %v1198, 4
        %v1201 = vor.u32 %v1200, %v1196
        %v1202 = vrot.slane %v1201, 4
        %v1204 = vshll.u32 %v846, 16
        %v1206 = vrot.slane %v1204, 5
        %v1207 = vsel %vm235, %v1202, %v1206
        %v1209 = vshrl.u32 %v830, 16
        %v1211 = vrot.slane %v1209, 4
        %v1212 = vshll.u32 %v830, 16
        %v1214 = vrot.slane %v1212, 5
        %v1215 = vor.u32 %v1211, %v1214
        %v1216 = vrot.slane %v1215, 4
        %v1218 = vshll.u32 %v831, 16
        %v1220 = vrot.slane %v1218, 5
        %v1221 = vsel %vm235, %v1216, %v1220
        %v1222 = vshrl.u32 %v831, 16
        %v1224 = vrot.slane %v1222, 4
        %v1225 = vor.u32 %v1224, %v1220
        %v1226 = vrot.slane %v1225, 4
        %v1228 = vshll.u32 %v847, 16
        %v1230 = vrot.slane %v1228, 5
        %v1231 = vsel %vm235, %v1226, %v1230
        %v1232 = vld [vmem:[%s799] sm:$0xe]
        %v1233 = vld [vmem:[%s799 + $0xc] sm:$0xe]
        %v1234 = vld [vmem:[%s799 + $0x18] sm:$0xe]
        %v1235 = vld [vmem:[%s799 + $0x24] sm:$0xe]
        %v1236 = vld [vmem:[%s799 + $0x30] sm:$0xe]
        %v1237 = vld [vmem:[%s799 + $0x3c] sm:$0xe]
        %v1238 = vld [vmem:[%s799 + $0x48] sm:$0xe]
        %v1239 = vld [vmem:[%s799 + $0x54] sm:$0xe]
        %v1240 = vld [vmem:[%s799 + $0x60] sm:$0xe]
        %v1241 = vld [vmem:[%s799 + $0x6c] sm:$0xe]
        %v1242 = vld [vmem:[%s799 + $0x78] sm:$0xe]
        %v1243 = vld [vmem:[%s799 + $0x84] sm:$0xe]
        %v1244 = vld [vmem:[%s799 + $0x90] sm:$0xe]
        %v1245 = vld [vmem:[%s799 + $0x9c] sm:$0xe]
        %v1246 = vld [vmem:[%s799 + $0xa8] sm:$0xe]
        %v1247 = vld [vmem:[%s799 + $0xb4] sm:$0xe]
        %v1296 = vrot.slane %v1232, 5
        %v1297 = vrot.slane %v1296, 4
        %v1298 = vrot.slane %v801, 5
        %v1299 = vsel %vm686, %v1297, %v1298
        %v1300 = vrot.slane %v1298, 4
        %v1301 = vrot.slane %v832, 5
        %v1302 = vsel %vm686, %v1300, %v1301
        %v1303 = vrot.slane %v1233, 5
        %v1304 = vrot.slane %v1303, 4
        %v1305 = vrot.slane %v803, 5
        %v1306 = vsel %vm686, %v1304, %v1305
        %v1307 = vrot.slane %v1305, 4
        %v1308 = vrot.slane %v833, 5
        %v1309 = vsel %vm686, %v1307, %v1308
        %v1310 = vrot.slane %v1234, 5
        %v1311 = vrot.slane %v1310, 4
        %v1312 = vrot.slane %v805, 5
        %v1313 = vsel %vm686, %v1311, %v1312
        %v1314 = vrot.slane %v1312, 4
        %v1315 = vrot.slane %v834, 5
        %v1316 = vsel %vm686, %v1314, %v1315
        %v1317 = vrot.slane %v1235, 5
        %v1318 = vrot.slane %v1317, 4
        %v1319 = vrot.slane %v807, 5
        %v1320 = vsel %vm686, %v1318, %v1319
        %v1321 = vrot.slane %v1319, 4
        %v1322 = vrot.slane %v835, 5
        %v1323 = vsel %vm686, %v1321, %v1322
        %v1324 = vrot.slane %v1236, 5
        %v1325 = vrot.slane %v1324, 4
        %v1326 = vrot.slane %v809, 5
        %v1327 = vsel %vm686, %v1325, %v1326
        %v1328 = vrot.slane %v1326, 4
        %v1329 = vrot.slane %v836, 5
        %v1330 = vsel %vm686, %v1328, %v1329
        %v1331 = vrot.slane %v1237, 5
        %v1332 = vrot.slane %v1331, 4
        %v1333 = vrot.slane %v811, 5
        %v1334 = vsel %vm686, %v1332, %v1333
        %v1335 = vrot.slane %v1333, 4
        %v1336 = vrot.slane %v837, 5
        %v1337 = vsel %vm686, %v1335, %v1336
        %v1338 = vrot.slane %v1238, 5
        %v1339 = vrot.slane %v1338, 4
        %v1340 = vrot.slane %v813, 5
        %v1341 = vsel %vm686, %v1339, %v1340
        %v1342 = vrot.slane %v1340, 4
        %v1343 = vrot.slane %v838, 5
        %v1344 = vsel %vm686, %v1342, %v1343
        %v1345 = vrot.slane %v1239, 5
        %v1346 = vrot.slane %v1345, 4
        %v1347 = vrot.slane %v815, 5
        %v1348 = vsel %vm686, %v1346, %v1347
        %v1349 = vrot.slane %v1347, 4
        %v1350 = vrot.slane %v839, 5
        %v1351 = vsel %vm686, %v1349, %v1350
        %v1352 = vrot.slane %v1240, 5
        %v1353 = vrot.slane %v1352, 4
        %v1354 = vrot.slane %v817, 5
        %v1355 = vsel %vm686, %v1353, %v1354
        %v1356 = vrot.slane %v1354, 4
        %v1357 = vrot.slane %v840, 5
        %v1358 = vsel %vm686, %v1356, %v1357
        %v1359 = vrot.slane %v1241, 5
        %v1360 = vrot.slane %v1359, 4
        %v1361 = vrot.slane %v819, 5
        %v1362 = vsel %vm686, %v1360, %v1361
        %v1363 = vrot.slane %v1361, 4
        %v1364 = vrot.slane %v841, 5
        %v1365 = vsel %vm686, %v1363, %v1364
        %v1366 = vrot.slane %v1242, 5
        %v1367 = vrot.slane %v1366, 4
        %v1368 = vrot.slane %v821, 5
        %v1369 = vsel %vm686, %v1367, %v1368
        %v1370 = vrot.slane %v1368, 4
        %v1371 = vrot.slane %v842, 5
        %v1372 = vsel %vm686, %v1370, %v1371
        %v1373 = vrot.slane %v1243, 5
        %v1374 = vrot.slane %v1373, 4
        %v1375 = vrot.slane %v823, 5
        %v1376 = vsel %vm686, %v1374, %v1375
        %v1377 = vrot.slane %v1375, 4
        %v1378 = vrot.slane %v843, 5
        %v1379 = vsel %vm686, %v1377, %v1378
        %v1380 = vrot.slane %v1244, 5
        %v1381 = vrot.slane %v1380, 4
        %v1382 = vrot.slane %v825, 5
        %v1383 = vsel %vm686, %v1381, %v1382
        %v1384 = vrot.slane %v1382, 4
        %v1385 = vrot.slane %v844, 5
        %v1386 = vsel %vm686, %v1384, %v1385
        %v1387 = vrot.slane %v1245, 5
        %v1388 = vrot.slane %v1387, 4
        %v1389 = vrot.slane %v827, 5
        %v1390 = vsel %vm686, %v1388, %v1389
        %v1391 = vrot.slane %v1389, 4
        %v1392 = vrot.slane %v845, 5
        %v1393 = vsel %vm686, %v1391, %v1392
        %v1394 = vrot.slane %v1246, 5
        %v1395 = vrot.slane %v1394, 4
        %v1396 = vrot.slane %v829, 5
        %v1397 = vsel %vm686, %v1395, %v1396
        %v1398 = vrot.slane %v1396, 4
        %v1399 = vrot.slane %v846, 5
        %v1400 = vsel %vm686, %v1398, %v1399
        %v1401 = vrot.slane %v1247, 5
        %v1402 = vrot.slane %v1401, 4
        %v1403 = vrot.slane %v831, 5
        %v1404 = vsel %vm686, %v1402, %v1403
        %v1405 = vrot.slane %v1403, 4
        %v1406 = vrot.slane %v847, 5
        %v1407 = vsel %vm686, %v1405, %v1406
        %s1408 = scalar_lea.vmem %s182, 24
        %v1409 = vld [vmem:[%s1408] sm:$0xf]
        %v1410 = vld [vmem:[%s1408 + $0x4] sm:$0xf]
        %v1411 = vld [vmem:[%s1408 + $0xc] sm:$0xf]
        %v1412 = vld [vmem:[%s1408 + $0x10] sm:$0xf]
        %v1413 = vld [vmem:[%s1408 + $0x18] sm:$0xf]
        %v1414 = vld [vmem:[%s1408 + $0x1c] sm:$0xf]
        %v1415 = vld [vmem:[%s1408 + $0x24] sm:$0xf]
        %v1416 = vld [vmem:[%s1408 + $0x28] sm:$0xf]
        %v1417 = vld [vmem:[%s1408 + $0x30] sm:$0xf]
        %v1418 = vld [vmem:[%s1408 + $0x34] sm:$0xf]
        %v1419 = vld [vmem:[%s1408 + $0x3c] sm:$0xf]
        %v1420 = vld [vmem:[%s1408 + $0x40] sm:$0xf]
        %v1421 = vld [vmem:[%s1408 + $0x48] sm:$0xf]
        %v1422 = vld [vmem:[%s1408 + $0x4c] sm:$0xf]
        %v1423 = vld [vmem:[%s1408 + $0x54] sm:$0xf]
        %v1424 = vld [vmem:[%s1408 + $0x58] sm:$0xf]
        %v1425 = vld [vmem:[%s1408 + $0x60] sm:$0xf]
        %v1426 = vld [vmem:[%s1408 + $0x64] sm:$0xf]
        %v1427 = vld [vmem:[%s1408 + $0x6c] sm:$0xf]
        %v1428 = vld [vmem:[%s1408 + $0x70] sm:$0xf]
        %v1429 = vld [vmem:[%s1408 + $0x78] sm:$0xf]
        %v1430 = vld [vmem:[%s1408 + $0x7c] sm:$0xf]
        %v1431 = vld [vmem:[%s1408 + $0x84] sm:$0xf]
        %v1432 = vld [vmem:[%s1408 + $0x88] sm:$0xf]
        %v1433 = vld [vmem:[%s1408 + $0x90] sm:$0xf]
        %v1434 = vld [vmem:[%s1408 + $0x94] sm:$0xf]
        %v1435 = vld [vmem:[%s1408 + $0x9c] sm:$0xf]
        %v1436 = vld [vmem:[%s1408 + $0xa0] sm:$0xf]
        %v1437 = vld [vmem:[%s1408 + $0xa8] sm:$0xf]
        %v1438 = vld [vmem:[%s1408 + $0xac] sm:$0xf]
        %v1439 = vld [vmem:[%s1408 + $0xb4] sm:$0xf]
        %v1440 = vld [vmem:[%s1408 + $0xb8] sm:$0xf]
        %v1441 = vld [vmem:[%s1408 + $0x8] sm:$0x1]
        %v1442 = vld [vmem:[%s1408 + $0x14] sm:$0x1]
        %v1443 = vld [vmem:[%s1408 + $0x20] sm:$0x1]
        %v1444 = vld [vmem:[%s1408 + $0x2c] sm:$0x1]
        %v1445 = vld [vmem:[%s1408 + $0x38] sm:$0x1]
        %v1446 = vld [vmem:[%s1408 + $0x44] sm:$0x1]
        %v1447 = vld [vmem:[%s1408 + $0x50] sm:$0x1]
        %v1448 = vld [vmem:[%s1408 + $0x5c] sm:$0x1]
        %v1449 = vld [vmem:[%s1408 + $0x68] sm:$0x1]
        %v1450 = vld [vmem:[%s1408 + $0x74] sm:$0x1]
        %v1451 = vld [vmem:[%s1408 + $0x80] sm:$0x1]
        %v1452 = vld [vmem:[%s1408 + $0x8c] sm:$0x1]
        %v1453 = vld [vmem:[%s1408 + $0x98] sm:$0x1]
        %v1454 = vld [vmem:[%s1408 + $0xa4] sm:$0x1]
        %v1455 = vld [vmem:[%s1408 + $0xb0] sm:$0x1]
        %v1456 = vld [vmem:[%s1408 + $0xbc] sm:$0x1]
        %v1458 = vshrl.u32 %v1409, 16
        %v1460 = vrot.slane %v1458, 4
        %v1461 = vshll.u32 %v1409, 16
        %v1463 = vrot.slane %v1461, 5
        %v1464 = vor.u32 %v1460, %v1463
        %v1465 = vrot.slane %v1464, 4
        %v1467 = vshll.u32 %v1410, 16
        %v1469 = vrot.slane %v1467, 5
        %v1470 = vsel %vm235, %v1465, %v1469
        %v1471 = vshrl.u32 %v1410, 16
        %v1473 = vrot.slane %v1471, 4
        %v1474 = vor.u32 %v1473, %v1469
        %v1475 = vrot.slane %v1474, 4
        %v1477 = vshll.u32 %v1441, 16
        %v1479 = vrot.slane %v1477, 5
        %v1480 = vsel %vm235, %v1475, %v1479
        %v1482 = vshrl.u32 %v1411, 16
        %v1484 = vrot.slane %v1482, 4
        %v1485 = vshll.u32 %v1411, 16
        %v1487 = vrot.slane %v1485, 5
        %v1488 = vor.u32 %v1484, %v1487
        %v1489 = vrot.slane %v1488, 4
        %v1491 = vshll.u32 %v1412, 16
        %v1493 = vrot.slane %v1491, 5
        %v1494 = vsel %vm235, %v1489, %v1493
        %v1495 = vshrl.u32 %v1412, 16
        %v1497 = vrot.slane %v1495, 4
        %v1498 = vor.u32 %v1497, %v1493
        %v1499 = vrot.slane %v1498, 4
        %v1501 = vshll.u32 %v1442, 16
        %v1503 = vrot.slane %v1501, 5
        %v1504 = vsel %vm235, %v1499, %v1503
        %v1506 = vshrl.u32 %v1413, 16
        %v1508 = vrot.slane %v1506, 4
        %v1509 = vshll.u32 %v1413, 16
        %v1511 = vrot.slane %v1509, 5
        %v1512 = vor.u32 %v1508, %v1511
        %v1513 = vrot.slane %v1512, 4
        %v1515 = vshll.u32 %v1414, 16
        %v1517 = vrot.slane %v1515, 5
        %v1518 = vsel %vm235, %v1513, %v1517
        %v1519 = vshrl.u32 %v1414, 16
        %v1521 = vrot.slane %v1519, 4
        %v1522 = vor.u32 %v1521, %v1517
        %v1523 = vrot.slane %v1522, 4
        %v1525 = vshll.u32 %v1443, 16
        %v1527 = vrot.slane %v1525, 5
        %v1528 = vsel %vm235, %v1523, %v1527
        %v1530 = vshrl.u32 %v1415, 16
        %v1532 = vrot.slane %v1530, 4
        %v1533 = vshll.u32 %v1415, 16
        %v1535 = vrot.slane %v1533, 5
        %v1536 = vor.u32 %v1532, %v1535
        %v1537 = vrot.slane %v1536, 4
        %v1539 = vshll.u32 %v1416, 16
        %v1541 = vrot.slane %v1539, 5
        %v1542 = vsel %vm235, %v1537, %v1541
        %v1543 = vshrl.u32 %v1416, 16
        %v1545 = vrot.slane %v1543, 4
        %v1546 = vor.u32 %v1545, %v1541
        %v1547 = vrot.slane %v1546, 4
        %v1549 = vshll.u32 %v1444, 16
        %v1551 = vrot.slane %v1549, 5
        %v1552 = vsel %vm235, %v1547, %v1551
        %v1554 = vshrl.u32 %v1417, 16
        %v1556 = vrot.slane %v1554, 4
        %v1557 = vshll.u32 %v1417, 16
        %v1559 = vrot.slane %v1557, 5
        %v1560 = vor.u32 %v1556, %v1559
        %v1561 = vrot.slane %v1560, 4
        %v1563 = vshll.u32 %v1418, 16
        %v1565 = vrot.slane %v1563, 5
        %v1566 = vsel %vm235, %v1561, %v1565
        %v1567 = vshrl.u32 %v1418, 16
        %v1569 = vrot.slane %v1567, 4
        %v1570 = vor.u32 %v1569, %v1565
        %v1571 = vrot.slane %v1570, 4
        %v1573 = vshll.u32 %v1445, 16
        %v1575 = vrot.slane %v1573, 5
        %v1576 = vsel %vm235, %v1571, %v1575
        %v1578 = vshrl.u32 %v1419, 16
        %v1580 = vrot.slane %v1578, 4
        %v1581 = vshll.u32 %v1419, 16
        %v1583 = vrot.slane %v1581, 5
        %v1584 = vor.u32 %v1580, %v1583
        %v1585 = vrot.slane %v1584, 4
        %v1587 = vshll.u32 %v1420, 16
        %v1589 = vrot.slane %v1587, 5
        %v1590 = vsel %vm235, %v1585, %v1589
        %v1591 = vshrl.u32 %v1420, 16
        %v1593 = vrot.slane %v1591, 4
        %v1594 = vor.u32 %v1593, %v1589
        %v1595 = vrot.slane %v1594, 4
        %v1597 = vshll.u32 %v1446, 16
        %v1599 = vrot.slane %v1597, 5
        %v1600 = vsel %vm235, %v1595, %v1599
        %v1602 = vshrl.u32 %v1421, 16
        %v1604 = vrot.slane %v1602, 4
        %v1605 = vshll.u32 %v1421, 16
        %v1607 = vrot.slane %v1605, 5
        %v1608 = vor.u32 %v1604, %v1607
        %v1609 = vrot.slane %v1608, 4
        %v1611 = vshll.u32 %v1422, 16
        %v1613 = vrot.slane %v1611, 5
        %v1614 = vsel %vm235, %v1609, %v1613
        %v1615 = vshrl.u32 %v1422, 16
        %v1617 = vrot.slane %v1615, 4
        %v1618 = vor.u32 %v1617, %v1613
        %v1619 = vrot.slane %v1618, 4
        %v1621 = vshll.u32 %v1447, 16
        %v1623 = vrot.slane %v1621, 5
        %v1624 = vsel %vm235, %v1619, %v1623
        %v1626 = vshrl.u32 %v1423, 16
        %v1628 = vrot.slane %v1626, 4
        %v1629 = vshll.u32 %v1423, 16
        %v1631 = vrot.slane %v1629, 5
        %v1632 = vor.u32 %v1628, %v1631
        %v1633 = vrot.slane %v1632, 4
        %v1635 = vshll.u32 %v1424, 16
        %v1637 = vrot.slane %v1635, 5
        %v1638 = vsel %vm235, %v1633, %v1637
        %v1639 = vshrl.u32 %v1424, 16
        %v1641 = vrot.slane %v1639, 4
        %v1642 = vor.u32 %v1641, %v1637
        %v1643 = vrot.slane %v1642, 4
        %v1645 = vshll.u32 %v1448, 16
        %v1647 = vrot.slane %v1645, 5
        %v1648 = vsel %vm235, %v1643, %v1647
        %v1650 = vshrl.u32 %v1425, 16
        %v1652 = vrot.slane %v1650, 4
        %v1653 = vshll.u32 %v1425, 16
        %v1655 = vrot.slane %v1653, 5
        %v1656 = vor.u32 %v1652, %v1655
        %v1657 = vrot.slane %v1656, 4
        %v1659 = vshll.u32 %v1426, 16
        %v1661 = vrot.slane %v1659, 5
        %v1662 = vsel %vm235, %v1657, %v1661
        %v1663 = vshrl.u32 %v1426, 16
        %v1665 = vrot.slane %v1663, 4
        %v1666 = vor.u32 %v1665, %v1661
        %v1667 = vrot.slane %v1666, 4
        %v1669 = vshll.u32 %v1449, 16
        %v1671 = vrot.slane %v1669, 5
        %v1672 = vsel %vm235, %v1667, %v1671
        %v1674 = vshrl.u32 %v1427, 16
        %v1676 = vrot.slane %v1674, 4
        %v1677 = vshll.u32 %v1427, 16
        %v1679 = vrot.slane %v1677, 5
        %v1680 = vor.u32 %v1676, %v1679
        %v1681 = vrot.slane %v1680, 4
        %v1683 = vshll.u32 %v1428, 16
        %v1685 = vrot.slane %v1683, 5
        %v1686 = vsel %vm235, %v1681, %v1685
        %v1687 = vshrl.u32 %v1428, 16
        %v1689 = vrot.slane %v1687, 4
        %v1690 = vor.u32 %v1689, %v1685
        %v1691 = vrot.slane %v1690, 4
        %v1693 = vshll.u32 %v1450, 16
        %v1695 = vrot.slane %v1693, 5
        %v1696 = vsel %vm235, %v1691, %v1695
        %v1698 = vshrl.u32 %v1429, 16
        %v1700 = vrot.slane %v1698, 4
        %v1701 = vshll.u32 %v1429, 16
        %v1703 = vrot.slane %v1701, 5
        %v1704 = vor.u32 %v1700, %v1703
        %v1705 = vrot.slane %v1704, 4
        %v1707 = vshll.u32 %v1430, 16
        %v1709 = vrot.slane %v1707, 5
        %v1710 = vsel %vm235, %v1705, %v1709
        %v1711 = vshrl.u32 %v1430, 16
        %v1713 = vrot.slane %v1711, 4
        %v1714 = vor.u32 %v1713, %v1709
        %v1715 = vrot.slane %v1714, 4
        %v1717 = vshll.u32 %v1451, 16
        %v1719 = vrot.slane %v1717, 5
        %v1720 = vsel %vm235, %v1715, %v1719
        %v1722 = vshrl.u32 %v1431, 16
        %v1724 = vrot.slane %v1722, 4
        %v1725 = vshll.u32 %v1431, 16
        %v1727 = vrot.slane %v1725, 5
        %v1728 = vor.u32 %v1724, %v1727
        %v1729 = vrot.slane %v1728, 4
        %v1731 = vshll.u32 %v1432, 16
        %v1733 = vrot.slane %v1731, 5
        %v1734 = vsel %vm235, %v1729, %v1733
        %v1735 = vshrl.u32 %v1432, 16
        %v1737 = vrot.slane %v1735, 4
        %v1738 = vor.u32 %v1737, %v1733
        %v1739 = vrot.slane %v1738, 4
        %v1741 = vshll.u32 %v1452, 16
        %v1743 = vrot.slane %v1741, 5
        %v1744 = vsel %vm235, %v1739, %v1743
        %v1746 = vshrl.u32 %v1433, 16
        %v1748 = vrot.slane %v1746, 4
        %v1749 = vshll.u32 %v1433, 16
        %v1751 = vrot.slane %v1749, 5
        %v1752 = vor.u32 %v1748, %v1751
        %v1753 = vrot.slane %v1752, 4
        %v1755 = vshll.u32 %v1434, 16
        %v1757 = vrot.slane %v1755, 5
        %v1758 = vsel %vm235, %v1753, %v1757
        %v1759 = vshrl.u32 %v1434, 16
        %v1761 = vrot.slane %v1759, 4
        %v1762 = vor.u32 %v1761, %v1757
        %v1763 = vrot.slane %v1762, 4
        %v1765 = vshll.u32 %v1453, 16
        %v1767 = vrot.slane %v1765, 5
        %v1768 = vsel %vm235, %v1763, %v1767
        %v1770 = vshrl.u32 %v1435, 16
        %v1772 = vrot.slane %v1770, 4
        %v1773 = vshll.u32 %v1435, 16
        %v1775 = vrot.slane %v1773, 5
        %v1776 = vor.u32 %v1772, %v1775
        %v1777 = vrot.slane %v1776, 4
        %v1779 = vshll.u32 %v1436, 16
        %v1781 = vrot.slane %v1779, 5
        %v1782 = vsel %vm235, %v1777, %v1781
        %v1783 = vshrl.u32 %v1436, 16
        %v1785 = vrot.slane %v1783, 4
        %v1786 = vor.u32 %v1785, %v1781
        %v1787 = vrot.slane %v1786, 4
        %v1789 = vshll.u32 %v1454, 16
        %v1791 = vrot.slane %v1789, 5
        %v1792 = vsel %vm235, %v1787, %v1791
        %v1794 = vshrl.u32 %v1437, 16
        %v1796 = vrot.slane %v1794, 4
        %v1797 = vshll.u32 %v1437, 16
        %v1799 = vrot.slane %v1797, 5
        %v1800 = vor.u32 %v1796, %v1799
        %v1801 = vrot.slane %v1800, 4
        %v1803 = vshll.u32 %v1438, 16
        %v1805 = vrot.slane %v1803, 5
        %v1806 = vsel %vm235, %v1801, %v1805
        %v1807 = vshrl.u32 %v1438, 16
        %v1809 = vrot.slane %v1807, 4
        %v1810 = vor.u32 %v1809, %v1805
        %v1811 = vrot.slane %v1810, 4
        %v1813 = vshll.u32 %v1455, 16
        %v1815 = vrot.slane %v1813, 5
        %v1816 = vsel %vm235, %v1811, %v1815
        %v1818 = vshrl.u32 %v1439, 16
        %v1820 = vrot.slane %v1818, 4
        %v1821 = vshll.u32 %v1439, 16
        %v1823 = vrot.slane %v1821, 5
        %v1824 = vor.u32 %v1820, %v1823
        %v1825 = vrot.slane %v1824, 4
        %v1827 = vshll.u32 %v1440, 16
        %v1829 = vrot.slane %v1827, 5
        %v1830 = vsel %vm235, %v1825, %v1829
        %v1831 = vshrl.u32 %v1440, 16
        %v1833 = vrot.slane %v1831, 4
        %v1834 = vor.u32 %v1833, %v1829
        %v1835 = vrot.slane %v1834, 4
        %v1837 = vshll.u32 %v1456, 16
        %v1839 = vrot.slane %v1837, 5
        %v1840 = vsel %vm235, %v1835, %v1839
        %v1841 = vld [vmem:[%s1408] sm:$0xe]
        %v1842 = vld [vmem:[%s1408 + $0xc] sm:$0xe]
        %v1843 = vld [vmem:[%s1408 + $0x18] sm:$0xe]
        %v1844 = vld [vmem:[%s1408 + $0x24] sm:$0xe]
        %v1845 = vld [vmem:[%s1408 + $0x30] sm:$0xe]
        %v1846 = vld [vmem:[%s1408 + $0x3c] sm:$0xe]
        %v1847 = vld [vmem:[%s1408 + $0x48] sm:$0xe]
        %v1848 = vld [vmem:[%s1408 + $0x54] sm:$0xe]
        %v1849 = vld [vmem:[%s1408 + $0x60] sm:$0xe]
        %v1850 = vld [vmem:[%s1408 + $0x6c] sm:$0xe]
        %v1851 = vld [vmem:[%s1408 + $0x78] sm:$0xe]
        %v1852 = vld [vmem:[%s1408 + $0x84] sm:$0xe]
        %v1853 = vld [vmem:[%s1408 + $0x90] sm:$0xe]
        %v1854 = vld [vmem:[%s1408 + $0x9c] sm:$0xe]
        %v1855 = vld [vmem:[%s1408 + $0xa8] sm:$0xe]
        %v1856 = vld [vmem:[%s1408 + $0xb4] sm:$0xe]
        %v1905 = vrot.slane %v1841, 5
        %v1906 = vrot.slane %v1905, 4
        %v1907 = vrot.slane %v1410, 5
        %v1908 = vsel %vm686, %v1906, %v1907
        %v1909 = vrot.slane %v1907, 4
        %v1910 = vrot.slane %v1441, 5
        %v1911 = vsel %vm686, %v1909, %v1910
        %v1912 = vrot.slane %v1842, 5
        %v1913 = vrot.slane %v1912, 4
        %v1914 = vrot.slane %v1412, 5
        %v1915 = vsel %vm686, %v1913, %v1914
        %v1916 = vrot.slane %v1914, 4
        %v1917 = vrot.slane %v1442, 5
        %v1918 = vsel %vm686, %v1916, %v1917
        %v1919 = vrot.slane %v1843, 5
        %v1920 = vrot.slane %v1919, 4
        %v1921 = vrot.slane %v1414, 5
        %v1922 = vsel %vm686, %v1920, %v1921
        %v1923 = vrot.slane %v1921, 4
        %v1924 = vrot.slane %v1443, 5
        %v1925 = vsel %vm686, %v1923, %v1924
        %v1926 = vrot.slane %v1844, 5
        %v1927 = vrot.slane %v1926, 4
        %v1928 = vrot.slane %v1416, 5
        %v1929 = vsel %vm686, %v1927, %v1928
        %v1930 = vrot.slane %v1928, 4
        %v1931 = vrot.slane %v1444, 5
        %v1932 = vsel %vm686, %v1930, %v1931
        %v1933 = vrot.slane %v1845, 5
        %v1934 = vrot.slane %v1933, 4
        %v1935 = vrot.slane %v1418, 5
        %v1936 = vsel %vm686, %v1934, %v1935
        %v1937 = vrot.slane %v1935, 4
        %v1938 = vrot.slane %v1445, 5
        %v1939 = vsel %vm686, %v1937, %v1938
        %v1940 = vrot.slane %v1846, 5
        %v1941 = vrot.slane %v1940, 4
        %v1942 = vrot.slane %v1420, 5
        %v1943 = vsel %vm686, %v1941, %v1942
        %v1944 = vrot.slane %v1942, 4
        %v1945 = vrot.slane %v1446, 5
        %v1946 = vsel %vm686, %v1944, %v1945
        %v1947 = vrot.slane %v1847, 5
        %v1948 = vrot.slane %v1947, 4
        %v1949 = vrot.slane %v1422, 5
        %v1950 = vsel %vm686, %v1948, %v1949
        %v1951 = vrot.slane %v1949, 4
        %v1952 = vrot.slane %v1447, 5
        %v1953 = vsel %vm686, %v1951, %v1952
        %v1954 = vrot.slane %v1848, 5
        %v1955 = vrot.slane %v1954, 4
        %v1956 = vrot.slane %v1424, 5
        %v1957 = vsel %vm686, %v1955, %v1956
        %v1958 = vrot.slane %v1956, 4
        %v1959 = vrot.slane %v1448, 5
        %v1960 = vsel %vm686, %v1958, %v1959
        %v1961 = vrot.slane %v1849, 5
        %v1962 = vrot.slane %v1961, 4
        %v1963 = vrot.slane %v1426, 5
        %v1964 = vsel %vm686, %v1962, %v1963
        %v1965 = vrot.slane %v1963, 4
        %v1966 = vrot.slane %v1449, 5
        %v1967 = vsel %vm686, %v1965, %v1966
        %v1968 = vrot.slane %v1850, 5
        %v1969 = vrot.slane %v1968, 4
        %v1970 = vrot.slane %v1428, 5
        %v1971 = vsel %vm686, %v1969, %v1970
        %v1972 = vrot.slane %v1970, 4
        %v1973 = vrot.slane %v1450, 5
        %v1974 = vsel %vm686, %v1972, %v1973
        %v1975 = vrot.slane %v1851, 5
        %v1976 = vrot.slane %v1975, 4
        %v1977 = vrot.slane %v1430, 5
        %v1978 = vsel %vm686, %v1976, %v1977
        %v1979 = vrot.slane %v1977, 4
        %v1980 = vrot.slane %v1451, 5
        %v1981 = vsel %vm686, %v1979, %v1980
        %v1982 = vrot.slane %v1852, 5
        %v1983 = vrot.slane %v1982, 4
        %v1984 = vrot.slane %v1432, 5
        %v1985 = vsel %vm686, %v1983, %v1984
        %v1986 = vrot.slane %v1984, 4
        %v1987 = vrot.slane %v1452, 5
        %v1988 = vsel %vm686, %v1986, %v1987
        %v1989 = vrot.slane %v1853, 5
        %v1990 = vrot.slane %v1989, 4
        %v1991 = vrot.slane %v1434, 5
        %v1992 = vsel %vm686, %v1990, %v1991
        %v1993 = vrot.slane %v1991, 4
        %v1994 = vrot.slane %v1453, 5
        %v1995 = vsel %vm686, %v1993, %v1994
        %v1996 = vrot.slane %v1854, 5
        %v1997 = vrot.slane %v1996, 4
        %v1998 = vrot.slane %v1436, 5
        %v1999 = vsel %vm686, %v1997, %v1998
        %v2000 = vrot.slane %v1998, 4
        %v2001 = vrot.slane %v1454, 5
        %v2002 = vsel %vm686, %v2000, %v2001
        %v2003 = vrot.slane %v1855, 5
        %v2004 = vrot.slane %v2003, 4
        %v2005 = vrot.slane %v1438, 5
        %v2006 = vsel %vm686, %v2004, %v2005
        %v2007 = vrot.slane %v2005, 4
        %v2008 = vrot.slane %v1455, 5
        %v2009 = vsel %vm686, %v2007, %v2008
        %v2010 = vrot.slane %v1856, 5
        %v2011 = vrot.slane %v2010, 4
        %v2012 = vrot.slane %v1440, 5
        %v2013 = vsel %vm686, %v2011, %v2012
        %v2014 = vrot.slane %v2012, 4
        %v2015 = vrot.slane %v1456, 5
        %v2016 = vsel %vm686, %v2014, %v2015
        %v2033 = vunpack.c.l.b16 %v185
        %v2034 = vunpack.c.l.b16 %v186
        %v2035 = vunpack.c.l.b16 %v187
        %v2036 = vunpack.c.l.b16 %v188
        %v2037 = vunpack.c.l.b16 %v189
        %v2038 = vunpack.c.l.b16 %v190
        %v2039 = vunpack.c.l.b16 %v191
        %v2040 = vunpack.c.l.b16 %v192
        %v2041 = vunpack.c.l.b16 %v193
        %v2042 = vunpack.c.l.b16 %v194
        %v2043 = vunpack.c.l.b16 %v195
        %v2044 = vunpack.c.l.b16 %v196
        %v2045 = vunpack.c.l.b16 %v197
        %v2046 = vunpack.c.l.b16 %v198
        %v2047 = vunpack.c.l.b16 %v199
        %v2048 = vunpack.c.l.b16 %v200
        %v2049 = vunpack.c.l.b16 %v201
        %v2050 = vunpack.c.l.b16 %v202
        %v2051 = vunpack.c.l.b16 %v203
        %v2052 = vunpack.c.l.b16 %v204
        %v2053 = vunpack.c.l.b16 %v205
        %v2054 = vunpack.c.l.b16 %v206
        %v2055 = vunpack.c.l.b16 %v207
        %v2056 = vunpack.c.l.b16 %v208
        %v2057 = vunpack.c.l.b16 %v209
        %v2058 = vunpack.c.l.b16 %v210
        %v2059 = vunpack.c.l.b16 %v211
        %v2060 = vunpack.c.l.b16 %v212
        %v2061 = vunpack.c.l.b16 %v213
        %v2062 = vunpack.c.l.b16 %v214
        %v2063 = vunpack.c.l.b16 %v215
        %v2064 = vunpack.c.l.b16 %v216
        %v2065 = vpack.c.b16 %v2034, %v2033
        %v2066 = vpack.c.b16 %v2036, %v2035
        %v2067 = vpack.c.b16 %v2038, %v2037
        %v2068 = vpack.c.b16 %v2040, %v2039
        %v2069 = vpack.c.b16 %v2042, %v2041
        %v2070 = vpack.c.b16 %v2044, %v2043
        %v2071 = vpack.c.b16 %v2046, %v2045
        %v2072 = vpack.c.b16 %v2048, %v2047
        %v2073 = vpack.c.b16 %v2050, %v2049
        %v2074 = vpack.c.b16 %v2052, %v2051
        %v2075 = vpack.c.b16 %v2054, %v2053
        %v2076 = vpack.c.b16 %v2056, %v2055
        %v2077 = vpack.c.b16 %v2058, %v2057
        %v2078 = vpack.c.b16 %v2060, %v2059
        %v2079 = vpack.c.b16 %v2062, %v2061
        %v2080 = vpack.c.b16 %v2064, %v2063
        %v2081 = vunpack.c.l.b16 %v249
        %v2082 = vunpack.c.l.b16 %v259
        %v2083 = vunpack.c.l.b16 %v273
        %v2084 = vunpack.c.l.b16 %v283
        %v2085 = vunpack.c.l.b16 %v297
        %v2086 = vunpack.c.l.b16 %v307
        %v2087 = vunpack.c.l.b16 %v321
        %v2088 = vunpack.c.l.b16 %v331
        %v2089 = vunpack.c.l.b16 %v345
        %v2090 = vunpack.c.l.b16 %v355
        %v2091 = vunpack.c.l.b16 %v369
        %v2092 = vunpack.c.l.b16 %v379
        %v2093 = vunpack.c.l.b16 %v393
        %v2094 = vunpack.c.l.b16 %v403
        %v2095 = vunpack.c.l.b16 %v417
        %v2096 = vunpack.c.l.b16 %v427
        %v2097 = vunpack.c.l.b16 %v441
        %v2098 = vunpack.c.l.b16 %v451
        %v2099 = vunpack.c.l.b16 %v465
        %v2100 = vunpack.c.l.b16 %v475
        %v2101 = vunpack.c.l.b16 %v489
        %v2102 = vunpack.c.l.b16 %v499
        %v2103 = vunpack.c.l.b16 %v513
        %v2104 = vunpack.c.l.b16 %v523
        %v2105 = vunpack.c.l.b16 %v537
        %v2106 = vunpack.c.l.b16 %v547
        %v2107 = vunpack.c.l.b16 %v561
        %v2108 = vunpack.c.l.b16 %v571
        %v2109 = vunpack.c.l.b16 %v585
        %v2110 = vunpack.c.l.b16 %v595
        %v2111 = vunpack.c.l.b16 %v609
        %v2112 = vunpack.c.l.b16 %v619
        %v2113 = vpack.c.b16 %v2082, %v2081
        %v2114 = vpack.c.b16 %v2084, %v2083
        %v2115 = vpack.c.b16 %v2086, %v2085
        %v2116 = vpack.c.b16 %v2088, %v2087
        %v2117 = vpack.c.b16 %v2090, %v2089
        %v2118 = vpack.c.b16 %v2092, %v2091
        %v2119 = vpack.c.b16 %v2094, %v2093
        %v2120 = vpack.c.b16 %v2096, %v2095
        %v2121 = vpack.c.b16 %v2098, %v2097
        %v2122 = vpack.c.b16 %v2100, %v2099
        %v2123 = vpack.c.b16 %v2102, %v2101
        %v2124 = vpack.c.b16 %v2104, %v2103
        %v2125 = vpack.c.b16 %v2106, %v2105
        %v2126 = vpack.c.b16 %v2108, %v2107
        %v2127 = vpack.c.b16 %v2110, %v2109
        %v2128 = vpack.c.b16 %v2112, %v2111
        %2129 = vrot.lane.b32.xlu0 %v2113, 3
        %v2130 = vpop.permute.xlu0 %2129
        %2131 = vrot.lane.b32.xlu0 %v2114, 3
        %v2132 = vpop.permute.xlu0 %2131
        %2133 = vrot.lane.b32.xlu0 %v2115, 3
        %v2134 = vpop.permute.xlu0 %2133
        %2135 = vrot.lane.b32.xlu0 %v2116, 3
        %v2136 = vpop.permute.xlu0 %2135
        %2137 = vrot.lane.b32.xlu0 %v2117, 3
        %v2138 = vpop.permute.xlu0 %2137
        %2139 = vrot.lane.b32.xlu0 %v2118, 3
        %v2140 = vpop.permute.xlu0 %2139
        %2141 = vrot.lane.b32.xlu0 %v2119, 3
        %v2142 = vpop.permute.xlu0 %2141
        %2143 = vrot.lane.b32.xlu0 %v2120, 3
        %v2144 = vpop.permute.xlu0 %2143
        %2145 = vrot.lane.b32.xlu0 %v2121, 3
        %v2146 = vpop.permute.xlu0 %2145
        %2147 = vrot.lane.b32.xlu0 %v2122, 3
        %v2148 = vpop.permute.xlu0 %2147
        %2149 = vrot.lane.b32.xlu0 %v2123, 3
        %v2150 = vpop.permute.xlu0 %2149
        %2151 = vrot.lane.b32.xlu0 %v2124, 3
        %v2152 = vpop.permute.xlu0 %2151
        %2153 = vrot.lane.b32.xlu0 %v2125, 3
        %v2154 = vpop.permute.xlu0 %2153
        %2155 = vrot.lane.b32.xlu0 %v2126, 3
        %v2156 = vpop.permute.xlu0 %2155
        %2157 = vrot.lane.b32.xlu0 %v2127, 3
        %v2158 = vpop.permute.xlu0 %2157
        %2159 = vrot.lane.b32.xlu0 %v2128, 3
        %v2160 = vpop.permute.xlu0 %2159
        %v2161 = vunpack.c.l.b16 %v690
        %v2162 = vunpack.c.l.b16 %v693
        %v2163 = vunpack.c.l.b16 %v697
        %v2164 = vunpack.c.l.b16 %v700
        %v2165 = vunpack.c.l.b16 %v704
        %v2166 = vunpack.c.l.b16 %v707
        %v2167 = vunpack.c.l.b16 %v711
        %v2168 = vunpack.c.l.b16 %v714
        %v2169 = vunpack.c.l.b16 %v718
        %v2170 = vunpack.c.l.b16 %v721
        %v2171 = vunpack.c.l.b16 %v725
        %v2172 = vunpack.c.l.b16 %v728
        %v2173 = vunpack.c.l.b16 %v732
        %v2174 = vunpack.c.l.b16 %v735
        %v2175 = vunpack.c.l.b16 %v739
        %v2176 = vunpack.c.l.b16 %v742
        %v2177 = vunpack.c.l.b16 %v746
        %v2178 = vunpack.c.l.b16 %v749
        %v2179 = vunpack.c.l.b16 %v753
        %v2180 = vunpack.c.l.b16 %v756
        %v2181 = vunpack.c.l.b16 %v760
        %v2182 = vunpack.c.l.b16 %v763
        %v2183 = vunpack.c.l.b16 %v767
        %v2184 = vunpack.c.l.b16 %v770
        %v2185 = vunpack.c.l.b16 %v774
        %v2186 = vunpack.c.l.b16 %v777
        %v2187 = vunpack.c.l.b16 %v781
        %v2188 = vunpack.c.l.b16 %v784
        %v2189 = vunpack.c.l.b16 %v788
        %v2190 = vunpack.c.l.b16 %v791
        %v2191 = vunpack.c.l.b16 %v795
        %v2192 = vunpack.c.l.b16 %v798
        %v2193 = vpack.c.b16 %v2162, %v2161
        %v2194 = vpack.c.b16 %v2164, %v2163
        %v2195 = vpack.c.b16 %v2166, %v2165
        %v2196 = vpack.c.b16 %v2168, %v2167
        %v2197 = vpack.c.b16 %v2170, %v2169
        %v2198 = vpack.c.b16 %v2172, %v2171
        %v2199 = vpack.c.b16 %v2174, %v2173
        %v2200 = vpack.c.b16 %v2176, %v2175
        %v2201 = vpack.c.b16 %v2178, %v2177
        %v2202 = vpack.c.b16 %v2180, %v2179
        %v2203 = vpack.c.b16 %v2182, %v2181
        %v2204 = vpack.c.b16 %v2184, %v2183
        %v2205 = vpack.c.b16 %v2186, %v2185
        %v2206 = vpack.c.b16 %v2188, %v2187
        %v2207 = vpack.c.b16 %v2190, %v2189
        %v2208 = vpack.c.b16 %v2192, %v2191
        %2209 = vrot.lane.b32.xlu0 %v2193, 6
        %v2210 = vpop.permute.xlu0 %2209
        %2211 = vrot.lane.b32.xlu0 %v2194, 6
        %v2212 = vpop.permute.xlu0 %2211
        %2213 = vrot.lane.b32.xlu0 %v2195, 6
        %v2214 = vpop.permute.xlu0 %2213
        %2215 = vrot.lane.b32.xlu0 %v2196, 6
        %v2216 = vpop.permute.xlu0 %2215
        %2217 = vrot.lane.b32.xlu0 %v2197, 6
        %v2218 = vpop.permute.xlu0 %2217
        %2219 = vrot.lane.b32.xlu0 %v2198, 6
        %v2220 = vpop.permute.xlu0 %2219
        %2221 = vrot.lane.b32.xlu0 %v2199, 6
        %v2222 = vpop.permute.xlu0 %2221
        %2223 = vrot.lane.b32.xlu0 %v2200, 6
        %v2224 = vpop.permute.xlu0 %2223
        %2225 = vrot.lane.b32.xlu0 %v2201, 6
        %v2226 = vpop.permute.xlu0 %2225
        %2227 = vrot.lane.b32.xlu0 %v2202, 6
        %v2228 = vpop.permute.xlu0 %2227
        %2229 = vrot.lane.b32.xlu0 %v2203, 6
        %v2230 = vpop.permute.xlu0 %2229
        %2231 = vrot.lane.b32.xlu0 %v2204, 6
        %v2232 = vpop.permute.xlu0 %2231
        %2233 = vrot.lane.b32.xlu0 %v2205, 6
        %v2234 = vpop.permute.xlu0 %2233
        %2235 = vrot.lane.b32.xlu0 %v2206, 6
        %v2236 = vpop.permute.xlu0 %2235
        %2237 = vrot.lane.b32.xlu0 %v2207, 6
        %v2238 = vpop.permute.xlu0 %2237
        %2239 = vrot.lane.b32.xlu0 %v2208, 6
        %v2240 = vpop.permute.xlu0 %2239
        %v2257 = vunpack.c.l.b16 %v800
        %v2258 = vunpack.c.l.b16 %v801
        %v2259 = vunpack.c.l.b16 %v802
        %v2260 = vunpack.c.l.b16 %v803
        %v2261 = vunpack.c.l.b16 %v804
        %v2262 = vunpack.c.l.b16 %v805
        %v2263 = vunpack.c.l.b16 %v806
        %v2264 = vunpack.c.l.b16 %v807
        %v2265 = vunpack.c.l.b16 %v808
        %v2266 = vunpack.c.l.b16 %v809
        %v2267 = vunpack.c.l.b16 %v810
        %v2268 = vunpack.c.l.b16 %v811
        %v2269 = vunpack.c.l.b16 %v812
        %v2270 = vunpack.c.l.b16 %v813
        %v2271 = vunpack.c.l.b16 %v814
        %v2272 = vunpack.c.l.b16 %v815
        %v2273 = vunpack.c.l.b16 %v816
        %v2274 = vunpack.c.l.b16 %v817
        %v2275 = vunpack.c.l.b16 %v818
        %v2276 = vunpack.c.l.b16 %v819
        %v2277 = vunpack.c.l.b16 %v820
        %v2278 = vunpack.c.l.b16 %v821
        %v2279 = vunpack.c.l.b16 %v822
        %v2280 = vunpack.c.l.b16 %v823
        %v2281 = vunpack.c.l.b16 %v824
        %v2282 = vunpack.c.l.b16 %v825
        %v2283 = vunpack.c.l.b16 %v826
        %v2284 = vunpack.c.l.b16 %v827
        %v2285 = vunpack.c.l.b16 %v828
        %v2286 = vunpack.c.l.b16 %v829
        %v2287 = vunpack.c.l.b16 %v830
        %v2288 = vunpack.c.l.b16 %v831
        %v2289 = vpack.c.b16 %v2258, %v2257
        %v2290 = vpack.c.b16 %v2260, %v2259
        %v2291 = vpack.c.b16 %v2262, %v2261
        %v2292 = vpack.c.b16 %v2264, %v2263
        %v2293 = vpack.c.b16 %v2266, %v2265
        %v2294 = vpack.c.b16 %v2268, %v2267
        %v2295 = vpack.c.b16 %v2270, %v2269
        %v2296 = vpack.c.b16 %v2272, %v2271
        %v2297 = vpack.c.b16 %v2274, %v2273
        %v2298 = vpack.c.b16 %v2276, %v2275
        %v2299 = vpack.c.b16 %v2278, %v2277
        %v2300 = vpack.c.b16 %v2280, %v2279
        %v2301 = vpack.c.b16 %v2282, %v2281
        %v2302 = vpack.c.b16 %v2284, %v2283
        %v2303 = vpack.c.b16 %v2286, %v2285
        %v2304 = vpack.c.b16 %v2288, %v2287
        %2305 = vrot.lane.b32.xlu0 %v2289, 9
        %v2306 = vpop.permute.xlu0 %2305
        %2307 = vrot.lane.b32.xlu0 %v2290, 9
        %v2308 = vpop.permute.xlu0 %2307
        %2309 = vrot.lane.b32.xlu0 %v2291, 9
        %v2310 = vpop.permute.xlu0 %2309
        %2311 = vrot.lane.b32.xlu0 %v2292, 9
        %v2312 = vpop.permute.xlu0 %2311
        %2313 = vrot.lane.b32.xlu0 %v2293, 9
        %v2314 = vpop.permute.xlu0 %2313
        %2315 = vrot.lane.b32.xlu0 %v2294, 9
        %v2316 = vpop.permute.xlu0 %2315
        %2317 = vrot.lane.b32.xlu0 %v2295, 9
        %v2318 = vpop.permute.xlu0 %2317
        %2319 = vrot.lane.b32.xlu0 %v2296, 9
        %v2320 = vpop.permute.xlu0 %2319
        %2321 = vrot.lane.b32.xlu0 %v2297, 9
        %v2322 = vpop.permute.xlu0 %2321
        %2323 = vrot.lane.b32.xlu0 %v2298, 9
        %v2324 = vpop.permute.xlu0 %2323
        %2325 = vrot.lane.b32.xlu0 %v2299, 9
        %v2326 = vpop.permute.xlu0 %2325
        %2327 = vrot.lane.b32.xlu0 %v2300, 9
        %v2328 = vpop.permute.xlu0 %2327
        %2329 = vrot.lane.b32.xlu0 %v2301, 9
        %v2330 = vpop.permute.xlu0 %2329
        %2331 = vrot.lane.b32.xlu0 %v2302, 9
        %v2332 = vpop.permute.xlu0 %2331
        %2333 = vrot.lane.b32.xlu0 %v2303, 9
        %v2334 = vpop.permute.xlu0 %2333
        %2335 = vrot.lane.b32.xlu0 %v2304, 9
        %v2336 = vpop.permute.xlu0 %2335
        %v2337 = vunpack.c.l.b16 %v861
        %v2338 = vunpack.c.l.b16 %v871
        %v2339 = vunpack.c.l.b16 %v885
        %v2340 = vunpack.c.l.b16 %v895
        %v2341 = vunpack.c.l.b16 %v909
        %v2342 = vunpack.c.l.b16 %v919
        %v2343 = vunpack.c.l.b16 %v933
        %v2344 = vunpack.c.l.b16 %v943
        %v2345 = vunpack.c.l.b16 %v957
        %v2346 = vunpack.c.l.b16 %v967
        %v2347 = vunpack.c.l.b16 %v981
        %v2348 = vunpack.c.l.b16 %v991
        %v2349 = vunpack.c.l.b16 %v1005
        %v2350 = vunpack.c.l.b16 %v1015
        %v2351 = vunpack.c.l.b16 %v1029
        %v2352 = vunpack.c.l.b16 %v1039
        %v2353 = vunpack.c.l.b16 %v1053
        %v2354 = vunpack.c.l.b16 %v1063
        %v2355 = vunpack.c.l.b16 %v1077
        %v2356 = vunpack.c.l.b16 %v1087
        %v2357 = vunpack.c.l.b16 %v1101
        %v2358 = vunpack.c.l.b16 %v1111
        %v2359 = vunpack.c.l.b16 %v1125
        %v2360 = vunpack.c.l.b16 %v1135
        %v2361 = vunpack.c.l.b16 %v1149
        %v2362 = vunpack.c.l.b16 %v1159
        %v2363 = vunpack.c.l.b16 %v1173
        %v2364 = vunpack.c.l.b16 %v1183
        %v2365 = vunpack.c.l.b16 %v1197
        %v2366 = vunpack.c.l.b16 %v1207
        %v2367 = vunpack.c.l.b16 %v1221
        %v2368 = vunpack.c.l.b16 %v1231
        %v2369 = vpack.c.b16 %v2338, %v2337
        %v2370 = vpack.c.b16 %v2340, %v2339
        %v2371 = vpack.c.b16 %v2342, %v2341
        %v2372 = vpack.c.b16 %v2344, %v2343
        %v2373 = vpack.c.b16 %v2346, %v2345
        %v2374 = vpack.c.b16 %v2348, %v2347
        %v2375 = vpack.c.b16 %v2350, %v2349
        %v2376 = vpack.c.b16 %v2352, %v2351
        %v2377 = vpack.c.b16 %v2354, %v2353
        %v2378 = vpack.c.b16 %v2356, %v2355
        %v2379 = vpack.c.b16 %v2358, %v2357
        %v2380 = vpack.c.b16 %v2360, %v2359
        %v2381 = vpack.c.b16 %v2362, %v2361
        %v2382 = vpack.c.b16 %v2364, %v2363
        %v2383 = vpack.c.b16 %v2366, %v2365
        %v2384 = vpack.c.b16 %v2368, %v2367
        %2385 = vrot.lane.b32.xlu0 %v2369, 12
        %v2386 = vpop.permute.xlu0 %2385
        %2387 = vrot.lane.b32.xlu0 %v2370, 12
        %v2388 = vpop.permute.xlu0 %2387
        %2389 = vrot.lane.b32.xlu0 %v2371, 12
        %v2390 = vpop.permute.xlu0 %2389
        %2391 = vrot.lane.b32.xlu0 %v2372, 12
        %v2392 = vpop.permute.xlu0 %2391
        %2393 = vrot.lane.b32.xlu0 %v2373, 12
        %v2394 = vpop.permute.xlu0 %2393
        %2395 = vrot.lane.b32.xlu0 %v2374, 12
        %v2396 = vpop.permute.xlu0 %2395
        %2397 = vrot.lane.b32.xlu0 %v2375, 12
        %v2398 = vpop.permute.xlu0 %2397
        %2399 = vrot.lane.b32.xlu0 %v2376, 12
        %v2400 = vpop.permute.xlu0 %2399
        %2401 = vrot.lane.b32.xlu0 %v2377, 12
        %v2402 = vpop.permute.xlu0 %2401
        %2403 = vrot.lane.b32.xlu0 %v2378, 12
        %v2404 = vpop.permute.xlu0 %2403
        %2405 = vrot.lane.b32.xlu0 %v2379, 12
        %v2406 = vpop.permute.xlu0 %2405
        %2407 = vrot.lane.b32.xlu0 %v2380, 12
        %v2408 = vpop.permute.xlu0 %2407
        %2409 = vrot.lane.b32.xlu0 %v2381, 12
        %v2410 = vpop.permute.xlu0 %2409
        %2411 = vrot.lane.b32.xlu0 %v2382, 12
        %v2412 = vpop.permute.xlu0 %2411
        %2413 = vrot.lane.b32.xlu0 %v2383, 12
        %v2414 = vpop.permute.xlu0 %2413
        %2415 = vrot.lane.b32.xlu0 %v2384, 12
        %v2416 = vpop.permute.xlu0 %2415
        %v2417 = vunpack.c.l.b16 %v1299
        %v2418 = vunpack.c.l.b16 %v1302
        %v2419 = vunpack.c.l.b16 %v1306
        %v2420 = vunpack.c.l.b16 %v1309
        %v2421 = vunpack.c.l.b16 %v1313
        %v2422 = vunpack.c.l.b16 %v1316
        %v2423 = vunpack.c.l.b16 %v1320
        %v2424 = vunpack.c.l.b16 %v1323
        %v2425 = vunpack.c.l.b16 %v1327
        %v2426 = vunpack.c.l.b16 %v1330
        %v2427 = vunpack.c.l.b16 %v1334
        %v2428 = vunpack.c.l.b16 %v1337
        %v2429 = vunpack.c.l.b16 %v1341
        %v2430 = vunpack.c.l.b16 %v1344
        %v2431 = vunpack.c.l.b16 %v1348
        %v2432 = vunpack.c.l.b16 %v1351
        %v2433 = vunpack.c.l.b16 %v1355
        %v2434 = vunpack.c.l.b16 %v1358
        %v2435 = vunpack.c.l.b16 %v1362
        %v2436 = vunpack.c.l.b16 %v1365
        %v2437 = vunpack.c.l.b16 %v1369
        %v2438 = vunpack.c.l.b16 %v1372
        %v2439 = vunpack.c.l.b16 %v1376
        %v2440 = vunpack.c.l.b16 %v1379
        %v2441 = vunpack.c.l.b16 %v1383
        %v2442 = vunpack.c.l.b16 %v1386
        %v2443 = vunpack.c.l.b16 %v1390
        %v2444 = vunpack.c.l.b16 %v1393
        %v2445 = vunpack.c.l.b16 %v1397
        %v2446 = vunpack.c.l.b16 %v1400
        %v2447 = vunpack.c.l.b16 %v1404
        %v2448 = vunpack.c.l.b16 %v1407
        %v2449 = vpack.c.b16 %v2418, %v2417
        %v2450 = vpack.c.b16 %v2420, %v2419
        %v2451 = vpack.c.b16 %v2422, %v2421
        %v2452 = vpack.c.b16 %v2424, %v2423
        %v2453 = vpack.c.b16 %v2426, %v2425
        %v2454 = vpack.c.b16 %v2428, %v2427
        %v2455 = vpack.c.b16 %v2430, %v2429
        %v2456 = vpack.c.b16 %v2432, %v2431
        %v2457 = vpack.c.b16 %v2434, %v2433
        %v2458 = vpack.c.b16 %v2436, %v2435
        %v2459 = vpack.c.b16 %v2438, %v2437
        %v2460 = vpack.c.b16 %v2440, %v2439
        %v2461 = vpack.c.b16 %v2442, %v2441
        %v2462 = vpack.c.b16 %v2444, %v2443
        %v2463 = vpack.c.b16 %v2446, %v2445
        %v2464 = vpack.c.b16 %v2448, %v2447
        %2465 = vrot.lane.b32.xlu0 %v2449, 15
        %v2466 = vpop.permute.xlu0 %2465
        %2467 = vrot.lane.b32.xlu0 %v2450, 15
        %v2468 = vpop.permute.xlu0 %2467
        %2469 = vrot.lane.b32.xlu0 %v2451, 15
        %v2470 = vpop.permute.xlu0 %2469
        %2471 = vrot.lane.b32.xlu0 %v2452, 15
        %v2472 = vpop.permute.xlu0 %2471
        %2473 = vrot.lane.b32.xlu0 %v2453, 15
        %v2474 = vpop.permute.xlu0 %2473
        %2475 = vrot.lane.b32.xlu0 %v2454, 15
        %v2476 = vpop.permute.xlu0 %2475
        %2477 = vrot.lane.b32.xlu0 %v2455, 15
        %v2478 = vpop.permute.xlu0 %2477
        %2479 = vrot.lane.b32.xlu0 %v2456, 15
        %v2480 = vpop.permute.xlu0 %2479
        %2481 = vrot.lane.b32.xlu0 %v2457, 15
        %v2482 = vpop.permute.xlu0 %2481
        %2483 = vrot.lane.b32.xlu0 %v2458, 15
        %v2484 = vpop.permute.xlu0 %2483
        %2485 = vrot.lane.b32.xlu0 %v2459, 15
        %v2486 = vpop.permute.xlu0 %2485
        %2487 = vrot.lane.b32.xlu0 %v2460, 15
        %v2488 = vpop.permute.xlu0 %2487
        %2489 = vrot.lane.b32.xlu0 %v2461, 15
        %v2490 = vpop.permute.xlu0 %2489
        %2491 = vrot.lane.b32.xlu0 %v2462, 15
        %v2492 = vpop.permute.xlu0 %2491
        %2493 = vrot.lane.b32.xlu0 %v2463, 15
        %v2494 = vpop.permute.xlu0 %2493
        %2495 = vrot.lane.b32.xlu0 %v2464, 15
        %v2496 = vpop.permute.xlu0 %2495
        %v2513 = vunpack.c.l.b16 %v1409
        %v2514 = vunpack.c.l.b16 %v1410
        %v2515 = vunpack.c.l.b16 %v1411
        %v2516 = vunpack.c.l.b16 %v1412
        %v2517 = vunpack.c.l.b16 %v1413
        %v2518 = vunpack.c.l.b16 %v1414
        %v2519 = vunpack.c.l.b16 %v1415
        %v2520 = vunpack.c.l.b16 %v1416
        %v2521 = vunpack.c.l.b16 %v1417
        %v2522 = vunpack.c.l.b16 %v1418
        %v2523 = vunpack.c.l.b16 %v1419
        %v2524 = vunpack.c.l.b16 %v1420
        %v2525 = vunpack.c.l.b16 %v1421
        %v2526 = vunpack.c.l.b16 %v1422
        %v2527 = vunpack.c.l.b16 %v1423
        %v2528 = vunpack.c.l.b16 %v1424
        %v2529 = vunpack.c.l.b16 %v1425
        %v2530 = vunpack.c.l.b16 %v1426
        %v2531 = vunpack.c.l.b16 %v1427
        %v2532 = vunpack.c.l.b16 %v1428
        %v2533 = vunpack.c.l.b16 %v1429
        %v2534 = vunpack.c.l.b16 %v1430
        %v2535 = vunpack.c.l.b16 %v1431
        %v2536 = vunpack.c.l.b16 %v1432
        %v2537 = vunpack.c.l.b16 %v1433
        %v2538 = vunpack.c.l.b16 %v1434
        %v2539 = vunpack.c.l.b16 %v1435
        %v2540 = vunpack.c.l.b16 %v1436
        %v2541 = vunpack.c.l.b16 %v1437
        %v2542 = vunpack.c.l.b16 %v1438
        %v2543 = vunpack.c.l.b16 %v1439
        %v2544 = vunpack.c.l.b16 %v1440
        %v2545 = vpack.c.b16 %v2514, %v2513
        %v2546 = vpack.c.b16 %v2516, %v2515
        %v2547 = vpack.c.b16 %v2518, %v2517
        %v2548 = vpack.c.b16 %v2520, %v2519
        %v2549 = vpack.c.b16 %v2522, %v2521
        %v2550 = vpack.c.b16 %v2524, %v2523
        %v2551 = vpack.c.b16 %v2526, %v2525
        %v2552 = vpack.c.b16 %v2528, %v2527
        %v2553 = vpack.c.b16 %v2530, %v2529
        %v2554 = vpack.c.b16 %v2532, %v2531
        %v2555 = vpack.c.b16 %v2534, %v2533
        %v2556 = vpack.c.b16 %v2536, %v2535
        %v2557 = vpack.c.b16 %v2538, %v2537
        %v2558 = vpack.c.b16 %v2540, %v2539
        %v2559 = vpack.c.b16 %v2542, %v2541
        %v2560 = vpack.c.b16 %v2544, %v2543
        %2561 = vrot.lane.b32.xlu0 %v2545, 18
        %v2562 = vpop.permute.xlu0 %2561
        %2563 = vrot.lane.b32.xlu0 %v2546, 18
        %v2564 = vpop.permute.xlu0 %2563
        %2565 = vrot.lane.b32.xlu0 %v2547, 18
        %v2566 = vpop.permute.xlu0 %2565
        %2567 = vrot.lane.b32.xlu0 %v2548, 18
        %v2568 = vpop.permute.xlu0 %2567
        %2569 = vrot.lane.b32.xlu0 %v2549, 18
        %v2570 = vpop.permute.xlu0 %2569
        %2571 = vrot.lane.b32.xlu0 %v2550, 18
        %v2572 = vpop.permute.xlu0 %2571
        %2573 = vrot.lane.b32.xlu0 %v2551, 18
        %v2574 = vpop.permute.xlu0 %2573
        %2575 = vrot.lane.b32.xlu0 %v2552, 18
        %v2576 = vpop.permute.xlu0 %2575
        %2577 = vrot.lane.b32.xlu0 %v2553, 18
        %v2578 = vpop.permute.xlu0 %2577
        %2579 = vrot.lane.b32.xlu0 %v2554, 18
        %v2580 = vpop.permute.xlu0 %2579
        %2581 = vrot.lane.b32.xlu0 %v2555, 18
        %v2582 = vpop.permute.xlu0 %2581
        %2583 = vrot.lane.b32.xlu0 %v2556, 18
        %v2584 = vpop.permute.xlu0 %2583
        %2585 = vrot.lane.b32.xlu0 %v2557, 18
        %v2586 = vpop.permute.xlu0 %2585
        %2587 = vrot.lane.b32.xlu0 %v2558, 18
        %v2588 = vpop.permute.xlu0 %2587
        %2589 = vrot.lane.b32.xlu0 %v2559, 18
        %v2590 = vpop.permute.xlu0 %2589
        %2591 = vrot.lane.b32.xlu0 %v2560, 18
        %v2592 = vpop.permute.xlu0 %2591
        %v2593 = vunpack.c.l.b16 %v1470
        %v2594 = vunpack.c.l.b16 %v1480
        %v2595 = vunpack.c.l.b16 %v1494
        %v2596 = vunpack.c.l.b16 %v1504
        %v2597 = vunpack.c.l.b16 %v1518
        %v2598 = vunpack.c.l.b16 %v1528
        %v2599 = vunpack.c.l.b16 %v1542
        %v2600 = vunpack.c.l.b16 %v1552
        %v2601 = vunpack.c.l.b16 %v1566
        %v2602 = vunpack.c.l.b16 %v1576
        %v2603 = vunpack.c.l.b16 %v1590
        %v2604 = vunpack.c.l.b16 %v1600
        %v2605 = vunpack.c.l.b16 %v1614
        %v2606 = vunpack.c.l.b16 %v1624
        %v2607 = vunpack.c.l.b16 %v1638
        %v2608 = vunpack.c.l.b16 %v1648
        %v2609 = vunpack.c.l.b16 %v1662
        %v2610 = vunpack.c.l.b16 %v1672
        %v2611 = vunpack.c.l.b16 %v1686
        %v2612 = vunpack.c.l.b16 %v1696
        %v2613 = vunpack.c.l.b16 %v1710
        %v2614 = vunpack.c.l.b16 %v1720
        %v2615 = vunpack.c.l.b16 %v1734
        %v2616 = vunpack.c.l.b16 %v1744
        %v2617 = vunpack.c.l.b16 %v1758
        %v2618 = vunpack.c.l.b16 %v1768
        %v2619 = vunpack.c.l.b16 %v1782
        %v2620 = vunpack.c.l.b16 %v1792
        %v2621 = vunpack.c.l.b16 %v1806
        %v2622 = vunpack.c.l.b16 %v1816
        %v2623 = vunpack.c.l.b16 %v1830
        %v2624 = vunpack.c.l.b16 %v1840
        %v2625 = vpack.c.b16 %v2594, %v2593
        %v2626 = vpack.c.b16 %v2596, %v2595
        %v2627 = vpack.c.b16 %v2598, %v2597
        %v2628 = vpack.c.b16 %v2600, %v2599
        %v2629 = vpack.c.b16 %v2602, %v2601
        %v2630 = vpack.c.b16 %v2604, %v2603
        %v2631 = vpack.c.b16 %v2606, %v2605
        %v2632 = vpack.c.b16 %v2608, %v2607
        %v2633 = vpack.c.b16 %v2610, %v2609
        %v2634 = vpack.c.b16 %v2612, %v2611
        %v2635 = vpack.c.b16 %v2614, %v2613
        %v2636 = vpack.c.b16 %v2616, %v2615
        %v2637 = vpack.c.b16 %v2618, %v2617
        %v2638 = vpack.c.b16 %v2620, %v2619
        %v2639 = vpack.c.b16 %v2622, %v2621
        %v2640 = vpack.c.b16 %v2624, %v2623
        %2641 = vrot.lane.b32.xlu0 %v2625, 21
        %v2642 = vpop.permute.xlu0 %2641
        %2643 = vrot.lane.b32.xlu0 %v2626, 21
        %v2644 = vpop.permute.xlu0 %2643
        %2645 = vrot.lane.b32.xlu0 %v2627, 21
        %v2646 = vpop.permute.xlu0 %2645
        %2647 = vrot.lane.b32.xlu0 %v2628, 21
        %v2648 = vpop.permute.xlu0 %2647
        %2649 = vrot.lane.b32.xlu0 %v2629, 21
        %v2650 = vpop.permute.xlu0 %2649
        %2651 = vrot.lane.b32.xlu0 %v2630, 21
        %v2652 = vpop.permute.xlu0 %2651
        %2653 = vrot.lane.b32.xlu0 %v2631, 21
        %v2654 = vpop.permute.xlu0 %2653
        %2655 = vrot.lane.b32.xlu0 %v2632, 21
        %v2656 = vpop.permute.xlu0 %2655
        %2657 = vrot.lane.b32.xlu0 %v2633, 21
        %v2658 = vpop.permute.xlu0 %2657
        %2659 = vrot.lane.b32.xlu0 %v2634, 21
        %v2660 = vpop.permute.xlu0 %2659
        %2661 = vrot.lane.b32.xlu0 %v2635, 21
        %v2662 = vpop.permute.xlu0 %2661
        %2663 = vrot.lane.b32.xlu0 %v2636, 21
        %v2664 = vpop.permute.xlu0 %2663
        %2665 = vrot.lane.b32.xlu0 %v2637, 21
        %v2666 = vpop.permute.xlu0 %2665
        %2667 = vrot.lane.b32.xlu0 %v2638, 21
        %v2668 = vpop.permute.xlu0 %2667
        %2669 = vrot.lane.b32.xlu0 %v2639, 21
        %v2670 = vpop.permute.xlu0 %2669
        %2671 = vrot.lane.b32.xlu0 %v2640, 21
        %v2672 = vpop.permute.xlu0 %2671
        %v2673 = vunpack.c.l.b16 %v1908
        %v2674 = vunpack.c.l.b16 %v1911
        %v2675 = vunpack.c.l.b16 %v1915
        %v2676 = vunpack.c.l.b16 %v1918
        %v2677 = vunpack.c.l.b16 %v1922
        %v2678 = vunpack.c.l.b16 %v1925
        %v2679 = vunpack.c.l.b16 %v1929
        %v2680 = vunpack.c.l.b16 %v1932
        %v2681 = vunpack.c.l.b16 %v1936
        %v2682 = vunpack.c.l.b16 %v1939
        %v2683 = vunpack.c.l.b16 %v1943
        %v2684 = vunpack.c.l.b16 %v1946
        %v2685 = vunpack.c.l.b16 %v1950
        %v2686 = vunpack.c.l.b16 %v1953
        %v2687 = vunpack.c.l.b16 %v1957
        %v2688 = vunpack.c.l.b16 %v1960
        %v2689 = vunpack.c.l.b16 %v1964
        %v2690 = vunpack.c.l.b16 %v1967
        %v2691 = vunpack.c.l.b16 %v1971
        %v2692 = vunpack.c.l.b16 %v1974
        %v2693 = vunpack.c.l.b16 %v1978
        %v2694 = vunpack.c.l.b16 %v1981
        %v2695 = vunpack.c.l.b16 %v1985
        %v2696 = vunpack.c.l.b16 %v1988
        %v2697 = vunpack.c.l.b16 %v1992
        %v2698 = vunpack.c.l.b16 %v1995
        %v2699 = vunpack.c.l.b16 %v1999
        %v2700 = vunpack.c.l.b16 %v2002
        %v2701 = vunpack.c.l.b16 %v2006
        %v2702 = vunpack.c.l.b16 %v2009
        %v2703 = vunpack.c.l.b16 %v2013
        %v2704 = vunpack.c.l.b16 %v2016
        %v2705 = vpack.c.b16 %v2674, %v2673
        %v2706 = vpack.c.b16 %v2676, %v2675
        %v2707 = vpack.c.b16 %v2678, %v2677
        %v2708 = vpack.c.b16 %v2680, %v2679
        %v2709 = vpack.c.b16 %v2682, %v2681
        %v2710 = vpack.c.b16 %v2684, %v2683
        %v2711 = vpack.c.b16 %v2686, %v2685
        %v2712 = vpack.c.b16 %v2688, %v2687
        %v2713 = vpack.c.b16 %v2690, %v2689
        %v2714 = vpack.c.b16 %v2692, %v2691
        %v2715 = vpack.c.b16 %v2694, %v2693
        %v2716 = vpack.c.b16 %v2696, %v2695
        %v2717 = vpack.c.b16 %v2698, %v2697
        %v2718 = vpack.c.b16 %v2700, %v2699
        %v2719 = vpack.c.b16 %v2702, %v2701
        %v2720 = vpack.c.b16 %v2704, %v2703
        %2721 = vrot.lane.b32.xlu0 %v2705, 24
        %v2722 = vpop.permute.xlu0 %2721
        %2723 = vrot.lane.b32.xlu0 %v2706, 24
        %v2724 = vpop.permute.xlu0 %2723
        %2725 = vrot.lane.b32.xlu0 %v2707, 24
        %v2726 = vpop.permute.xlu0 %2725
        %2727 = vrot.lane.b32.xlu0 %v2708, 24
        %v2728 = vpop.permute.xlu0 %2727
        %2729 = vrot.lane.b32.xlu0 %v2709, 24
        %v2730 = vpop.permute.xlu0 %2729
        %2731 = vrot.lane.b32.xlu0 %v2710, 24
        %v2732 = vpop.permute.xlu0 %2731
        %2733 = vrot.lane.b32.xlu0 %v2711, 24
        %v2734 = vpop.permute.xlu0 %2733
        %2735 = vrot.lane.b32.xlu0 %v2712, 24
        %v2736 = vpop.permute.xlu0 %2735
        %2737 = vrot.lane.b32.xlu0 %v2713, 24
        %v2738 = vpop.permute.xlu0 %2737
        %2739 = vrot.lane.b32.xlu0 %v2714, 24
        %v2740 = vpop.permute.xlu0 %2739
        %2741 = vrot.lane.b32.xlu0 %v2715, 24
        %v2742 = vpop.permute.xlu0 %2741
        %2743 = vrot.lane.b32.xlu0 %v2716, 24
        %v2744 = vpop.permute.xlu0 %2743
        %2745 = vrot.lane.b32.xlu0 %v2717, 24
        %v2746 = vpop.permute.xlu0 %2745
        %2747 = vrot.lane.b32.xlu0 %v2718, 24
        %v2748 = vpop.permute.xlu0 %2747
        %2749 = vrot.lane.b32.xlu0 %v2719, 24
        %v2750 = vpop.permute.xlu0 %2749
        %2751 = vrot.lane.b32.xlu0 %v2720, 24
        %v2752 = vpop.permute.xlu0 %2751
        %vm2753 = vcmask 23552
        %v2756 = vsel %vm2753, %v2065, %v2130
        %v2759 = vsel %vm2753, %v2066, %v2132
        %v2762 = vsel %vm2753, %v2067, %v2134
        %v2765 = vsel %vm2753, %v2068, %v2136
        %v2768 = vsel %vm2753, %v2069, %v2138
        %v2771 = vsel %vm2753, %v2070, %v2140
        %v2774 = vsel %vm2753, %v2071, %v2142
        %v2777 = vsel %vm2753, %v2072, %v2144
        %v2780 = vsel %vm2753, %v2073, %v2146
        %v2783 = vsel %vm2753, %v2074, %v2148
        %v2786 = vsel %vm2753, %v2075, %v2150
        %v2789 = vsel %vm2753, %v2076, %v2152
        %v2792 = vsel %vm2753, %v2077, %v2154
        %v2795 = vsel %vm2753, %v2078, %v2156
        %v2798 = vsel %vm2753, %v2079, %v2158
        %v2801 = vsel %vm2753, %v2080, %v2160
        %vm2802 = vcmask 48128
        %v2804 = vsel %vm2802, %v2756, %v2210
        %v2806 = vsel %vm2802, %v2759, %v2212
        %v2808 = vsel %vm2802, %v2762, %v2214
        %v2810 = vsel %vm2802, %v2765, %v2216
        %v2812 = vsel %vm2802, %v2768, %v2218
        %v2814 = vsel %vm2802, %v2771, %v2220
        %v2816 = vsel %vm2802, %v2774, %v2222
        %v2818 = vsel %vm2802, %v2777, %v2224
        %v2820 = vsel %vm2802, %v2780, %v2226
        %v2822 = vsel %vm2802, %v2783, %v2228
        %v2824 = vsel %vm2802, %v2786, %v2230
        %v2826 = vsel %vm2802, %v2789, %v2232
        %v2828 = vsel %vm2802, %v2792, %v2234
        %v2830 = vsel %vm2802, %v2795, %v2236
        %v2832 = vsel %vm2802, %v2798, %v2238
        %v2834 = vsel %vm2802, %v2801, %v2240
        %vm2835 = vcmask 72704
        %v2837 = vsel %vm2835, %v2804, %v2306
        %v2839 = vsel %vm2835, %v2806, %v2308
        %v2841 = vsel %vm2835, %v2808, %v2310
        %v2843 = vsel %vm2835, %v2810, %v2312
        %v2845 = vsel %vm2835, %v2812, %v2314
        %v2847 = vsel %vm2835, %v2814, %v2316
        %v2849 = vsel %vm2835, %v2816, %v2318
        %v2851 = vsel %vm2835, %v2818, %v2320
        %v2853 = vsel %vm2835, %v2820, %v2322
        %v2855 = vsel %vm2835, %v2822, %v2324
        %v2857 = vsel %vm2835, %v2824, %v2326
        %v2859 = vsel %vm2835, %v2826, %v2328
        %v2861 = vsel %vm2835, %v2828, %v2330
        %v2863 = vsel %vm2835, %v2830, %v2332
        %v2865 = vsel %vm2835, %v2832, %v2334
        %v2867 = vsel %vm2835, %v2834, %v2336
        %vm2868 = vcmask 97280
        %v2870 = vsel %vm2868, %v2837, %v2386
        %v2872 = vsel %vm2868, %v2839, %v2388
        %v2874 = vsel %vm2868, %v2841, %v2390
        %v2876 = vsel %vm2868, %v2843, %v2392
        %v2878 = vsel %vm2868, %v2845, %v2394
        %v2880 = vsel %vm2868, %v2847, %v2396
        %v2882 = vsel %vm2868, %v2849, %v2398
        %v2884 = vsel %vm2868, %v2851, %v2400
        %v2886 = vsel %vm2868, %v2853, %v2402
        %v2888 = vsel %vm2868, %v2855, %v2404
        %v2890 = vsel %vm2868, %v2857, %v2406
        %v2892 = vsel %vm2868, %v2859, %v2408
        %v2894 = vsel %vm2868, %v2861, %v2410
        %v2896 = vsel %vm2868, %v2863, %v2412
        %v2898 = vsel %vm2868, %v2865, %v2414
        %v2900 = vsel %vm2868, %v2867, %v2416
        %vm2901 = vcmask 121856
        %v2903 = vsel %vm2901, %v2870, %v2466
        %v2905 = vsel %vm2901, %v2872, %v2468
        %v2907 = vsel %vm2901, %v2874, %v2470
        %v2909 = vsel %vm2901, %v2876, %v2472
        %v2911 = vsel %vm2901, %v2878, %v2474
        %v2913 = vsel %vm2901, %v2880, %v2476
        %v2915 = vsel %vm2901, %v2882, %v2478
        %v2917 = vsel %vm2901, %v2884, %v2480
        %v2919 = vsel %vm2901, %v2886, %v2482
        %v2921 = vsel %vm2901, %v2888, %v2484
        %v2923 = vsel %vm2901, %v2890, %v2486
        %v2925 = vsel %vm2901, %v2892, %v2488
        %v2927 = vsel %vm2901, %v2894, %v2490
        %v2929 = vsel %vm2901, %v2896, %v2492
        %v2931 = vsel %vm2901, %v2898, %v2494
        %v2933 = vsel %vm2901, %v2900, %v2496
        %vm2934 = vcmask 146432
        %v2936 = vsel %vm2934, %v2903, %v2562
        %v2938 = vsel %vm2934, %v2905, %v2564
        %v2940 = vsel %vm2934, %v2907, %v2566
        %v2942 = vsel %vm2934, %v2909, %v2568
        %v2944 = vsel %vm2934, %v2911, %v2570
        %v2946 = vsel %vm2934, %v2913, %v2572
        %v2948 = vsel %vm2934, %v2915, %v2574
        %v2950 = vsel %vm2934, %v2917, %v2576
        %v2952 = vsel %vm2934, %v2919, %v2578
        %v2954 = vsel %vm2934, %v2921, %v2580
        %v2956 = vsel %vm2934, %v2923, %v2582
        %v2958 = vsel %vm2934, %v2925, %v2584
        %v2960 = vsel %vm2934, %v2927, %v2586
        %v2962 = vsel %vm2934, %v2929, %v2588
        %v2964 = vsel %vm2934, %v2931, %v2590
        %v2966 = vsel %vm2934, %v2933, %v2592
        %vm2967 = vcmask 171008
        %v2969 = vsel %vm2967, %v2936, %v2642
        %v2971 = vsel %vm2967, %v2938, %v2644
        %v2973 = vsel %vm2967, %v2940, %v2646
        %v2975 = vsel %vm2967, %v2942, %v2648
        %v2977 = vsel %vm2967, %v2944, %v2650
        %v2979 = vsel %vm2967, %v2946, %v2652
        %v2981 = vsel %vm2967, %v2948, %v2654
        %v2983 = vsel %vm2967, %v2950, %v2656
        %v2985 = vsel %vm2967, %v2952, %v2658
        %v2987 = vsel %vm2967, %v2954, %v2660
        %v2989 = vsel %vm2967, %v2956, %v2662
        %v2991 = vsel %vm2967, %v2958, %v2664
        %v2993 = vsel %vm2967, %v2960, %v2666
        %v2995 = vsel %vm2967, %v2962, %v2668
        %v2997 = vsel %vm2967, %v2964, %v2670
        %v2999 = vsel %vm2967, %v2966, %v2672
        %vm3000 = vcmask 195584
        %v3002 = vsel %vm3000, %v2969, %v2722
        %v3004 = vsel %vm3000, %v2971, %v2724
        %v3006 = vsel %vm3000, %v2973, %v2726
        %v3008 = vsel %vm3000, %v2975, %v2728
        %v3010 = vsel %vm3000, %v2977, %v2730
        %v3012 = vsel %vm3000, %v2979, %v2732
        %v3014 = vsel %vm3000, %v2981, %v2734
        %v3016 = vsel %vm3000, %v2983, %v2736
        %v3018 = vsel %vm3000, %v2985, %v2738
        %v3020 = vsel %vm3000, %v2987, %v2740
        %v3022 = vsel %vm3000, %v2989, %v2742
        %v3024 = vsel %vm3000, %v2991, %v2744
        %v3026 = vsel %vm3000, %v2993, %v2746
        %v3028 = vsel %vm3000, %v2995, %v2748
        %v3030 = vsel %vm3000, %v2997, %v2750
        %v3032 = vsel %vm3000, %v2999, %v2752
        %v3033 = vld [vmem:[%s1] sm:$0xf]
        %v3034 = vld [vmem:[%s1 + $0x4] sm:$0xf]
        %v3035 = vld [vmem:[%s1 + $0x8] sm:$0xf]
        %v3036 = vld [vmem:[%s1 + $0xc] sm:$0x3]
        %v3037 = vld [vmem:[%s2] sm:$0x1]
        %v3039 = vlaneseq
        %v3040 = vshrl.u32 %v3039, 7
        %v3041 = vsub.s32 0, %v3040
        %v3042 = vrot.slane %v3037, %v3041
        %v3048 = vunpack.c.l.b16 %v3033
        %v3049 = vunpack.c.l.b16 %v3034
        %v3050 = vunpack.c.l.b16 %v3035
        %v3051 = vunpack.c.l.b16 %v3036
        %v3052 = vpack.c.b16 %v3049, %v3048
        %v3053 = vpack.c.b16 %v3051, %v3050
        %vm3055 = vcmask 220160
        %v3056 = vsel %vm3055, %v3002, 0
        %v3058 = vsel %vm3055, %v3004, 0
        %v3060 = vsel %vm3055, %v3006, 0
        %v3062 = vsel %vm3055, %v3008, 0
        %v3064 = vsel %vm3055, %v3010, 0
        %v3066 = vsel %vm3055, %v3012, 0
        %v3068 = vsel %vm3055, %v3014, 0
        %v3070 = vsel %vm3055, %v3016, 0
        %v3072 = vsel %vm3055, %v3018, 0
        %v3074 = vsel %vm3055, %v3020, 0
        %v3076 = vsel %vm3055, %v3022, 0
        %v3078 = vsel %vm3055, %v3024, 0
        %v3080 = vsel %vm3055, %v3026, 0
        %v3082 = vsel %vm3055, %v3028, 0
        %v3084 = vsel %vm3055, %v3030, 0
        %v3086 = vsel %vm3055, %v3032, 0
        %vm3088 = vcmask 1044480
        %vm3089 = vcmask 1045504
        %v3090 = vsel %vm3088, 4294967295, 65535
        %v3091 = vsel %vm3089, %v3090, 0
        %v3093 = vand.u32 %v3053, %v3091
        %3095 = vmatprep.subr.bf16.mxu0 0
        %3096 = vmatpush1.bf16.msra.mxu0 %v3052
        %3097 = vmatprep.subr.bf16.mxu0 0
        %3098 = vmatpush1.bf16.msra.mxu0 %v3093
        %3099 = vmatprep.subr.bf16.mxu0 0
        %3100 = vmatpush1.bf16.msra.mxu0 0
        %3101 = vmatprep.subr.bf16.mxu0 0
        %3102 = vmatpush1.bf16.msra.mxu0 0
        %3103 = vmatprep.subr.bf16.mxu0 0
        %3104 = vmatpush1.bf16.msra.mxu0 0
        %3105 = vmatprep.subr.bf16.mxu0 0
        %3106 = vmatpush1.bf16.msra.mxu0 0
        %3107 = vmatprep.subr.bf16.mxu0 0
        %3108 = vmatpush1.bf16.msra.mxu0 0
        %3109 = vmatprep.subr.bf16.mxu0 0
        %3110 = vmatpush1.bf16.msra.mxu0 0
        %3111 = vmatprep.subr.bf16.mxu0 0
        %3112 = vmatpush1.bf16.msra.mxu0 0
        %3113 = vmatprep.subr.bf16.mxu0 0
        %3114 = vmatpush1.bf16.msra.mxu0 0
        %3115 = vmatprep.subr.bf16.mxu0 0
        %3116 = vmatpush1.bf16.msra.mxu0 0
        %3117 = vmatprep.subr.bf16.mxu0 0
        %3118 = vmatpush1.bf16.msra.mxu0 0
        %3119 = vmatprep.subr.bf16.mxu0 0
        %3120 = vmatpush1.bf16.msra.mxu0 0
        %3121 = vmatprep.subr.bf16.mxu0 0
        %3122 = vmatpush1.bf16.msra.mxu0 0
        %3123 = vmatprep.subr.bf16.mxu0 0
        %3124 = vmatpush1.bf16.msra.mxu0 0
        %3125 = vmatprep.subr.bf16.mxu0 0
        %3126 = vmatpush1.bf16.msra.mxu0 0
        %3127 = vmatprep.mubr.bf16.mxu0 0
        %3128 = vmatmul.mubr.bf16.gmra.mrb[0].mxu0 %v3056
        %v3129 = vpop.f32.mrb[0].mxu0
        %v3130 = vadd.f32 %v3042, %v3129
        %v3131 = vpop.f32.mrb[0].mxu0
        %v3132 = vpop.f32.mrb[0].mxu0
        %v3133 = vadd.f32 %v3042, %v3132
        %v3134 = vpop.f32.mrb[0].mxu0
        %3135 = vmatprep.mubr.bf16.mxu0 0
        %3136 = vmatmul.mubr.bf16.gmra.mrb[0].mxu0 %v3058
        %v3137 = vpop.f32.mrb[0].mxu0
        %v3138 = vadd.f32 %v3042, %v3137
        %v3139 = vpop.f32.mrb[0].mxu0
        %v3140 = vpop.f32.mrb[0].mxu0
        %v3141 = vadd.f32 %v3042, %v3140
        %v3142 = vpop.f32.mrb[0].mxu0
        %3143 = vmatprep.mubr.bf16.mxu0 0
        %3144 = vmatmul.mubr.bf16.gmra.mrb[0].mxu0 %v3060
        %v3145 = vpop.f32.mrb[0].mxu0
        %v3146 = vadd.f32 %v3042, %v3145
        %v3147 = vpop.f32.mrb[0].mxu0
        %v3148 = vpop.f32.mrb[0].mxu0
        %v3149 = vadd.f32 %v3042, %v3148
        %v3150 = vpop.f32.mrb[0].mxu0
        %3151 = vmatprep.mubr.bf16.mxu0 0
        %3152 = vmatmul.mubr.bf16.gmra.mrb[0].mxu0 %v3062
        %v3153 = vpop.f32.mrb[0].mxu0
        %v3154 = vadd.f32 %v3042, %v3153
        %v3155 = vpop.f32.mrb[0].mxu0
        %v3156 = vpop.f32.mrb[0].mxu0
        %v3157 = vadd.f32 %v3042, %v3156
        %v3158 = vpop.f32.mrb[0].mxu0
        %3159 = vmatprep.mubr.bf16.mxu0 0
        %3160 = vmatmul.mubr.bf16.gmra.mrb[0].mxu0 %v3064
        %v3161 = vpop.f32.mrb[0].mxu0
        %v3162 = vadd.f32 %v3042, %v3161
        %v3163 = vpop.f32.mrb[0].mxu0
        %v3164 = vpop.f32.mrb[0].mxu0
        %v3165 = vadd.f32 %v3042, %v3164
        %v3166 = vpop.f32.mrb[0].mxu0
        %3167 = vmatprep.mubr.bf16.mxu0 0
        %3168 = vmatmul.mubr.bf16.gmra.mrb[0].mxu0 %v3066
        %v3169 = vpop.f32.mrb[0].mxu0
        %v3170 = vadd.f32 %v3042, %v3169
        %v3171 = vpop.f32.mrb[0].mxu0
        %v3172 = vpop.f32.mrb[0].mxu0
        %v3173 = vadd.f32 %v3042, %v3172
        %v3174 = vpop.f32.mrb[0].mxu0
        %3175 = vmatprep.mubr.bf16.mxu0 0
        %3176 = vmatmul.mubr.bf16.gmra.mrb[0].mxu0 %v3068
        %v3177 = vpop.f32.mrb[0].mxu0
        %v3178 = vadd.f32 %v3042, %v3177
        %v3179 = vpop.f32.mrb[0].mxu0
        %v3180 = vpop.f32.mrb[0].mxu0
        %v3181 = vadd.f32 %v3042, %v3180
        %v3182 = vpop.f32.mrb[0].mxu0
        %3183 = vmatprep.mubr.bf16.mxu0 0
        %3184 = vmatmul.mubr.bf16.gmra.mrb[0].mxu0 %v3070
        %v3185 = vpop.f32.mrb[0].mxu0
        %v3186 = vadd.f32 %v3042, %v3185
        %v3187 = vpop.f32.mrb[0].mxu0
        %v3188 = vpop.f32.mrb[0].mxu0
        %v3189 = vadd.f32 %v3042, %v3188
        %v3190 = vpop.f32.mrb[0].mxu0
        %3191 = vmatprep.mubr.bf16.mxu0 0
        %3192 = vmatmul.mubr.bf16.gmra.mrb[0].mxu0 %v3072
        %v3193 = vpop.f32.mrb[0].mxu0
        %v3194 = vadd.f32 %v3042, %v3193
        %v3195 = vpop.f32.mrb[0].mxu0
        %v3196 = vpop.f32.mrb[0].mxu0
        %v3197 = vadd.f32 %v3042, %v3196
        %v3198 = vpop.f32.mrb[0].mxu0
        %3199 = vmatprep.mubr.bf16.mxu0 0
        %3200 = vmatmul.mubr.bf16.gmra.mrb[0].mxu0 %v3074
        %v3201 = vpop.f32.mrb[0].mxu0
        %v3202 = vadd.f32 %v3042, %v3201
        %v3203 = vpop.f32.mrb[0].mxu0
        %v3204 = vpop.f32.mrb[0].mxu0
        %v3205 = vadd.f32 %v3042, %v3204
        %v3206 = vpop.f32.mrb[0].mxu0
        %3207 = vmatprep.mubr.bf16.mxu0 0
        %3208 = vmatmul.mubr.bf16.gmra.mrb[0].mxu0 %v3076
        %v3209 = vpop.f32.mrb[0].mxu0
        %v3210 = vadd.f32 %v3042, %v3209
        %v3211 = vpop.f32.mrb[0].mxu0
        %v3212 = vpop.f32.mrb[0].mxu0
        %v3213 = vadd.f32 %v3042, %v3212
        %v3214 = vpop.f32.mrb[0].mxu0
        %3215 = vmatprep.mubr.bf16.mxu0 0
        %3216 = vmatmul.mubr.bf16.gmra.mrb[0].mxu0 %v3078
        %v3217 = vpop.f32.mrb[0].mxu0
        %v3218 = vadd.f32 %v3042, %v3217
        %v3219 = vpop.f32.mrb[0].mxu0
        %v3220 = vpop.f32.mrb[0].mxu0
        %v3221 = vadd.f32 %v3042, %v3220
        %v3222 = vpop.f32.mrb[0].mxu0
        %3223 = vmatprep.mubr.bf16.mxu0 0
        %3224 = vmatmul.mubr.bf16.gmra.mrb[0].mxu0 %v3080
        %v3225 = vpop.f32.mrb[0].mxu0
        %v3226 = vadd.f32 %v3042, %v3225
        %v3227 = vpop.f32.mrb[0].mxu0
        %v3228 = vpop.f32.mrb[0].mxu0
        %v3229 = vadd.f32 %v3042, %v3228
        %v3230 = vpop.f32.mrb[0].mxu0
        %3231 = vmatprep.mubr.bf16.mxu0 0
        %3232 = vmatmul.mubr.bf16.gmra.mrb[0].mxu0 %v3082
        %v3233 = vpop.f32.mrb[0].mxu0
        %v3234 = vadd.f32 %v3042, %v3233
        %v3235 = vpop.f32.mrb[0].mxu0
        %v3236 = vpop.f32.mrb[0].mxu0
        %v3237 = vadd.f32 %v3042, %v3236
        %v3238 = vpop.f32.mrb[0].mxu0
        %3239 = vmatprep.mubr.bf16.mxu0 0
        %3240 = vmatmul.mubr.bf16.gmra.mrb[0].mxu0 %v3084
        %v3241 = vpop.f32.mrb[0].mxu0
        %v3242 = vadd.f32 %v3042, %v3241
        %v3243 = vpop.f32.mrb[0].mxu0
        %v3244 = vpop.f32.mrb[0].mxu0
        %v3245 = vadd.f32 %v3042, %v3244
        %v3246 = vpop.f32.mrb[0].mxu0
        %3247 = vmatprep.mubr.bf16.mxu0 0
        %3248 = vmatmul.mubr.bf16.gmra.mrb[0].mxu0 %v3086
        %v3249 = vpop.f32.mrb[0].mxu0
        %v3250 = vadd.f32 %v3042, %v3249
        %v3251 = vpop.f32.mrb[0].mxu0
        %v3252 = vpop.f32.mrb[0].mxu0
        %v3253 = vadd.f32 %v3042, %v3252
        %v3254 = vpop.f32.mrb[0].mxu0
        %3255 = vdwg.mxu0
        %v3256 = vmax.f32 %v3130, 0.0
        %v3257 = vmax.f32 %v3133, 0.0
        %v3258 = vmax.f32 %v3138, 0.0
        %v3259 = vmax.f32 %v3141, 0.0
        %v3260 = vmax.f32 %v3146, 0.0
        %v3261 = vmax.f32 %v3149, 0.0
        %v3262 = vmax.f32 %v3154, 0.0
        %v3263 = vmax.f32 %v3157, 0.0
        %v3264 = vmax.f32 %v3162, 0.0
        %v3265 = vmax.f32 %v3165, 0.0
        %v3266 = vmax.f32 %v3170, 0.0
        %v3267 = vmax.f32 %v3173, 0.0
        %v3268 = vmax.f32 %v3178, 0.0
        %v3269 = vmax.f32 %v3181, 0.0
        %v3270 = vmax.f32 %v3186, 0.0
        %v3271 = vmax.f32 %v3189, 0.0
        %v3272 = vmax.f32 %v3194, 0.0
        %v3273 = vmax.f32 %v3197, 0.0
        %v3274 = vmax.f32 %v3202, 0.0
        %v3275 = vmax.f32 %v3205, 0.0
        %v3276 = vmax.f32 %v3210, 0.0
        %v3277 = vmax.f32 %v3213, 0.0
        %v3278 = vmax.f32 %v3218, 0.0
        %v3279 = vmax.f32 %v3221, 0.0
        %v3280 = vmax.f32 %v3226, 0.0
        %v3281 = vmax.f32 %v3229, 0.0
        %v3282 = vmax.f32 %v3234, 0.0
        %v3283 = vmax.f32 %v3237, 0.0
        %v3284 = vmax.f32 %v3242, 0.0
        %v3285 = vmax.f32 %v3245, 0.0
        %v3286 = vmax.f32 %v3250, 0.0
        %v3287 = vmax.f32 %v3253, 0.0
        %v3288 = vpack.c.bf16 %v3257, %v3256
        %v3289 = vpack.c.bf16 %v3259, %v3258
        %v3290 = vpack.c.bf16 %v3261, %v3260
        %v3291 = vpack.c.bf16 %v3263, %v3262
        %v3292 = vpack.c.bf16 %v3265, %v3264
        %v3293 = vpack.c.bf16 %v3267, %v3266
        %v3294 = vpack.c.bf16 %v3269, %v3268
        %v3295 = vpack.c.bf16 %v3271, %v3270
        %v3296 = vpack.c.bf16 %v3273, %v3272
        %v3297 = vpack.c.bf16 %v3275, %v3274
        %v3298 = vpack.c.bf16 %v3277, %v3276
        %v3299 = vpack.c.bf16 %v3279, %v3278
        %v3300 = vpack.c.bf16 %v3281, %v3280
        %v3301 = vpack.c.bf16 %v3283, %v3282
        %v3302 = vpack.c.bf16 %v3285, %v3284
        %v3303 = vpack.c.bf16 %v3287, %v3286
        %v3320 = vunpack.c.l.b16 %v3288
        %v3321 = vunpack.c.h.b16 %v3288
        %v3322 = vunpack.c.l.b16 %v3289
        %v3323 = vunpack.c.h.b16 %v3289
        %v3324 = vunpack.c.l.b16 %v3290
        %v3325 = vunpack.c.h.b16 %v3290
        %v3326 = vunpack.c.l.b16 %v3291
        %v3327 = vunpack.c.h.b16 %v3291
        %v3328 = vunpack.c.l.b16 %v3292
        %v3329 = vunpack.c.h.b16 %v3292
        %v3330 = vunpack.c.l.b16 %v3293
        %v3331 = vunpack.c.h.b16 %v3293
        %v3332 = vunpack.c.l.b16 %v3294
        %v3333 = vunpack.c.h.b16 %v3294
        %v3334 = vunpack.c.l.b16 %v3295
        %v3335 = vunpack.c.h.b16 %v3295
        %v3336 = vunpack.c.l.b16 %v3296
        %v3337 = vunpack.c.h.b16 %v3296
        %v3338 = vunpack.c.l.b16 %v3297
        %v3339 = vunpack.c.h.b16 %v3297
        %v3340 = vunpack.c.l.b16 %v3298
        %v3341 = vunpack.c.h.b16 %v3298
        %v3342 = vunpack.c.l.b16 %v3299
        %v3343 = vunpack.c.h.b16 %v3299
        %v3344 = vunpack.c.l.b16 %v3300
        %v3345 = vunpack.c.h.b16 %v3300
        %v3346 = vunpack.c.l.b16 %v3301
        %v3347 = vunpack.c.h.b16 %v3301
        %v3348 = vunpack.c.l.b16 %v3302
        %v3349 = vunpack.c.h.b16 %v3302
        %v3350 = vunpack.c.l.b16 %v3303
        %v3351 = vunpack.c.h.b16 %v3303
        %v3352 = vpack.c.b16 %v3320, %v3320
        %v3353 = vpack.c.b16 %v3321, %v3321
        %v3354 = vpack.c.b16 %v3322, %v3322
        %v3355 = vpack.c.b16 %v3323, %v3323
        %v3356 = vpack.c.b16 %v3324, %v3324
        %v3357 = vpack.c.b16 %v3325, %v3325
        %v3358 = vpack.c.b16 %v3326, %v3326
        %v3359 = vpack.c.b16 %v3327, %v3327
        %v3360 = vpack.c.b16 %v3328, %v3328
        %v3361 = vpack.c.b16 %v3329, %v3329
        %v3362 = vpack.c.b16 %v3330, %v3330
        %v3363 = vpack.c.b16 %v3331, %v3331
        %v3364 = vpack.c.b16 %v3332, %v3332
        %v3365 = vpack.c.b16 %v3333, %v3333
        %v3366 = vpack.c.b16 %v3334, %v3334
        %v3367 = vpack.c.b16 %v3335, %v3335
        %v3368 = vpack.c.b16 %v3336, %v3336
        %v3369 = vpack.c.b16 %v3337, %v3337
        %v3370 = vpack.c.b16 %v3338, %v3338
        %v3371 = vpack.c.b16 %v3339, %v3339
        %v3372 = vpack.c.b16 %v3340, %v3340
        %v3373 = vpack.c.b16 %v3341, %v3341
        %v3374 = vpack.c.b16 %v3342, %v3342
        %v3375 = vpack.c.b16 %v3343, %v3343
        %v3376 = vpack.c.b16 %v3344, %v3344
        %v3377 = vpack.c.b16 %v3345, %v3345
        %v3378 = vpack.c.b16 %v3346, %v3346
        %v3379 = vpack.c.b16 %v3347, %v3347
        %v3380 = vpack.c.b16 %v3348, %v3348
        %v3381 = vpack.c.b16 %v3349, %v3349
        %v3382 = vpack.c.b16 %v3350, %v3350
        %v3383 = vpack.c.b16 %v3351, %v3351
        %vm3416 = vcmask 125952
        %3417 = vst.msk [vmem:[%s177] sm:$0xf] %vm3416, %v3352
        %3418 = vst.msk [vmem:[%s177 + $0x4] sm:$0xf] %vm3416, %v3353
        %3419 = vst.msk [vmem:[%s177 + $0x8] sm:$0xf] %vm3416, %v3354
        %3420 = vst.msk [vmem:[%s177 + $0xc] sm:$0xf] %vm3416, %v3355
        %3421 = vst.msk [vmem:[%s177 + $0x10] sm:$0xf] %vm3416, %v3356
        %3422 = vst.msk [vmem:[%s177 + $0x14] sm:$0xf] %vm3416, %v3357
        %3423 = vst.msk [vmem:[%s177 + $0x18] sm:$0xf] %vm3416, %v3358
        %3424 = vst.msk [vmem:[%s177 + $0x1c] sm:$0xf] %vm3416, %v3359
        %3425 = vst.msk [vmem:[%s177 + $0x20] sm:$0xf] %vm3416, %v3360
        %3426 = vst.msk [vmem:[%s177 + $0x24] sm:$0xf] %vm3416, %v3361
        %3427 = vst.msk [vmem:[%s177 + $0x28] sm:$0xf] %vm3416, %v3362
        %3428 = vst.msk [vmem:[%s177 + $0x2c] sm:$0xf] %vm3416, %v3363
        %3429 = vst.msk [vmem:[%s177 + $0x30] sm:$0xf] %vm3416, %v3364
        %3430 = vst.msk [vmem:[%s177 + $0x34] sm:$0xf] %vm3416, %v3365
        %3431 = vst.msk [vmem:[%s177 + $0x38] sm:$0xf] %vm3416, %v3366
        %3432 = vst.msk [vmem:[%s177 + $0x3c] sm:$0xf] %vm3416, %v3367
        %3433 = vst.msk [vmem:[%s177 + $0x40] sm:$0xf] %vm3416, %v3368
        %3434 = vst.msk [vmem:[%s177 + $0x44] sm:$0xf] %vm3416, %v3369
        %3435 = vst.msk [vmem:[%s177 + $0x48] sm:$0xf] %vm3416, %v3370
        %3436 = vst.msk [vmem:[%s177 + $0x4c] sm:$0xf] %vm3416, %v3371
        %3437 = vst.msk [vmem:[%s177 + $0x50] sm:$0xf] %vm3416, %v3372
        %3438 = vst.msk [vmem:[%s177 + $0x54] sm:$0xf] %vm3416, %v3373
        %3439 = vst.msk [vmem:[%s177 + $0x58] sm:$0xf] %vm3416, %v3374
        %3440 = vst.msk [vmem:[%s177 + $0x5c] sm:$0xf] %vm3416, %v3375
        %3441 = vst.msk [vmem:[%s177 + $0x60] sm:$0xf] %vm3416, %v3376
        %3442 = vst.msk [vmem:[%s177 + $0x64] sm:$0xf] %vm3416, %v3377
        %3443 = vst.msk [vmem:[%s177 + $0x68] sm:$0xf] %vm3416, %v3378
        %3444 = vst.msk [vmem:[%s177 + $0x6c] sm:$0xf] %vm3416, %v3379
        %3445 = vst.msk [vmem:[%s177 + $0x70] sm:$0xf] %vm3416, %v3380
        %3446 = vst.msk [vmem:[%s177 + $0x74] sm:$0xf] %vm3416, %v3381
        %3447 = vst.msk [vmem:[%s177 + $0x78] sm:$0xf] %vm3416, %v3382
        %3448 = vst.msk [vmem:[%s177 + $0x7c] sm:$0xf] %vm3416, %v3383
        %s3449 = sand.u32 %s107, 1
        %s3450 = scalar_lea.sflag [#allocation3], %s3449
        %s3451 = sand.u32 %s107, 1
        %s3452 = smul.addr %s3451, 128
        %s3453 = scalar_lea.vmem [#allocation2], %s3452
        // Predicated region
        $region33: #{tpu_custom_call.1} parent=31 // pred_check
          %p3454 = pneg %p117
        $region34: #{tpu_custom_call.1} parent=31 // pred_check_branch
          %3456 = sbr.rel (%p3454) target = $region36
        $region35: #{tpu_custom_call.1} parent=31 // pred_region
          %s3457 = smul.u32 16, %s22
          %s3459 = ssub.s32 2048, 2048
          %3460 = vsyncadd %s3450, %s3459
          %s3461 = smul.addr %s3457, 2
          %s3462 = smul.addr %s21, 32
          %s3463 = sadd.s32 %s3461, %s3462
          %s3464 = smul.addr %s3463, 64
          %s3465 = scalar_lea.hbm %s3, %s3464
          %s3466 = sshll.u32 %s3453, 4
          %s3467 = int_to_ptr.vmem [resolvable:$true] %s3466
          %3472 = dma.vmem_to_hbm [thread:$0]  %s3467, 2048, %s3465, %s3450, 64, 64, 4
        $region36: #{tpu_custom_call.1} parent=31 // pred_fallthru
          _
      $region32: #{tpu_custom_call.1} parent=5 // pred_fallthru
        _
      %p3473 = scmp.le.s32.totalorder 2, %s12
      // Predicated region
      $region37: #{tpu_custom_call.1} parent=5 // pred_check
        %p3474 = pneg %p3473
      $region38: #{tpu_custom_call.1} parent=5 // pred_check_branch
        %3476 = sbr.rel (%p3474) target = $region40
      $region39: #{tpu_custom_call.1} parent=5 // pred_region
        %s3477 = ssub.s32 %s12, 2
        // Predicated region
        $region41: #{tpu_custom_call.1} parent=39 // pred_check
          %p3478 = pneg %p123
        $region42: #{tpu_custom_call.1} parent=39 // pred_check_branch
          %3480 = sbr.rel (%p3478) target = $region44
        $region43: #{tpu_custom_call.1} parent=39 // pred_region
          %s3481 = sand.u32 %s108, 1
          %s3482 = scalar_lea.sflag [#allocation3], %s3481
          %s3483 = sand.u32 %s108, 1
          %s3484 = smul.addr %s3483, 128
          %s3485 = scalar_lea.vmem [#allocation2], %s3484
          %3486 = dma.done %s3482, 2048
        $region44: #{tpu_custom_call.1} parent=39 // pred_fallthru
          _
      $region40: #{tpu_custom_call.1} parent=5 // pred_fallthru
        _
    $region6: #{tpu_custom_call.1} parent=1 // loop_footer
      %s16 = sadd.s32 1, %s12
    $region7: #{tpu_custom_call.1} parent=1 // loop_footer_branch
      %11 = sbr.rel target = $region3
    $region8: #{tpu_custom_call.1} parent=1 // loop_exit
      _
    %3487 = vsyncpa [#allocation3], 1
    %s3488 = scalar_lea.sflag [#allocation3], 1
    %3489 = vsyncpa %s3488, 1

</llo_original>
